<compile_context>
chip_gen: v7x
topology: tpu7x:2x2x1
jax: 0.10.0
libtpu: 0.0.40
codegen_flags: <defaults>
</compile_context>

<pallas_src>
import math
import functools

import jax
import jax.numpy as jnp
from jax.experimental import pallas as pl
from jax.experimental.pallas import tpu as pltpu


def mha_kernel(q_ref, k_ref, v_ref, amask_ref,
               wq_ref, wk_ref, wv_ref, wfc_ref,
               bq_ref, bk_ref, bv_ref, bfc_ref,
               o_ref, ctx_ref, *, heads, head_size, use_bf16_mxu):
    """One grid step == `nb` batch elements.

    q_ref/k_ref/v_ref : (nb, seq, embed) f32, embed last (lane-dense)
    amask_ref         : (nb, 1, q_len, k_len) f32 additive mask (0 keep / -1e30 masked)
    wq/wk/wv/wfc      : (embed, embed) pre-transposed (block-diagonal for q/k/v);
                        softmax scale already folded into wq/bq.
    bq/bk/bv/bfc      : (1, embed)
    o_ref             : (nb, q_len, embed)
    ctx_ref           : (nb, q_len, embed) f32 VMEM scratch (concat-of-heads buffer)
    """
    nb, q_len, embed = o_ref.shape
    k_len = k_ref.shape[1]
    mxu = jnp.bfloat16 if use_bf16_mxu else jnp.float32

    # ---- batched Q/K/V projections: one big lane-dense matmul each ----
    q2 = q_ref[...].reshape(nb * q_len, embed)
    k2 = k_ref[...].reshape(nb * k_len, embed)
    v2 = v_ref[...].reshape(nb * k_len, embed)

    qp = jnp.dot(q2.astype(mxu), wq_ref[...].astype(mxu),
                 preferred_element_type=jnp.float32) + bq_ref[...]
    kp = jnp.dot(k2.astype(mxu), wk_ref[...].astype(mxu),
                 preferred_element_type=jnp.float32) + bk_ref[...]
    vp = jnp.dot(v2.astype(mxu), wv_ref[...].astype(mxu),
                 preferred_element_type=jnp.float32) + bv_ref[...]

    # additive mask, broadcast over heads (scale already folded into qp)
    amask = amask_ref[...].reshape(nb, q_len, k_len)

    # ---- per-head attention: static lane slices + Nb-batched einsums ----
    for h in range(heads):          # small static loop; no carried accumulator
        sl = slice(h * head_size, (h + 1) * head_size)
        qh = qp[:, sl].reshape(nb, q_len, head_size)
        kh = kp[:, sl].reshape(nb, k_len, head_size)
        vh = vp[:, sl].reshape(nb, k_len, head_size)

        scores = jnp.einsum('bqz,bkz->bqk', qh.astype(mxu), kh.astype(mxu),
                            preferred_element_type=jnp.float32)
        scores = scores + amask     # masked entries -> ~-1e30 -> softmax weight 0

        m = jnp.max(scores, axis=-1, keepdims=True)
        p = jnp.exp(scores - m)
        denom = jnp.sum(p, axis=-1, keepdims=True)
        p = p * pl.reciprocal(denom, approx=True)

        ctx_h = jnp.einsum('bqk,bkz->bqz', p.astype(mxu), vh.astype(mxu),
                           preferred_element_type=jnp.float32)
        ctx_ref[:, :, sl] = ctx_h   # "concat" via static column-offset store

    # ---- single fused output projection over the concatenated heads ----
    ctx2 = ctx_ref[...].reshape(nb * q_len, embed)
    out = jnp.dot(ctx2.astype(mxu), wfc_ref[...].astype(mxu),
                  preferred_element_type=jnp.float32) + bfc_ref[...]
    o_ref[...] = out.reshape(nb, q_len, embed)


def _block_diag_T(w, heads):
    """kron(I_heads, w.T): block-diagonal (embed, embed) so that
    x(..., embed) @ result applies the shared per-head Linear to every head chunk."""
    return jnp.kron(jnp.eye(heads, dtype=w.dtype), w.T)


def multi_head_attention(values, keys, query, mask, params, *, heads,
                         batch_block=None, use_bf16_mxu=False):
    """values/keys/query: (N, seq, embed) f32; mask: (N, 1, q_len, k_len) int (1 keep, 0 mask) or None."""
    N, q_len, embed = query.shape
    k_len = keys.shape[1]
    v_len = values.shape[1]
    assert k_len == v_len
    head_size = embed // heads
    scale = 1.0 / math.sqrt(float(q_len))   # faithful to the module's torch.sqrt(query_size)

    wq, bq, wk, bk, wv, bv, wfc, bfc = params

    # Block-diagonal, pre-transposed projection weights; fold the softmax scale into the
    # query projection so there is zero per-head scale/mask-select work in the kernel.
    wqT = _block_diag_T(wq, heads) * scale
    wkT = _block_diag_T(wk, heads)
    wvT = _block_diag_T(wv, heads)
    wfcT = wfc.T
    if use_bf16_mxu:   # v6e/v7x: feed the MXU bf16 operands (f32 accumulation in-kernel)
        wqT, wkT, wvT, wfcT = (w.astype(jnp.bfloat16) for w in (wqT, wkT, wvT, wfcT))
    bqT = (jnp.tile(bq, heads) * scale).reshape(1, embed).astype(jnp.float32)
    bkT = jnp.tile(bk, heads).reshape(1, embed).astype(jnp.float32)
    bvT = jnp.tile(bv, heads).reshape(1, embed).astype(jnp.float32)
    bfcT = bfc.reshape(1, embed).astype(jnp.float32)

    # Additive mask: 0 keep / -1e30 masked.  (Fully-masked rows become uniform instead of
    # NaN, which the PyTorch masked_fill(-inf)+softmax reference would produce.)
    if mask is None:
        amask = jnp.zeros((N, 1, q_len, k_len), jnp.float32)
    else:
        amask = jnp.where(mask == 0, jnp.float32(-1e30), jnp.float32(0.0))
        amask = jnp.broadcast_to(amask, (N, 1, q_len, k_len)).astype(jnp.float32)

    if batch_block is None:
        # Amortize per-step overhead with multi-batch blocks, keep >=2 grid steps when
        # possible (both v7x TensorCores fed), and stay well inside the scoped-VMEM budget.
        bytes_per_b = 4 * (3 * q_len * embed + 2 * k_len * embed + q_len * k_len)
        vmem_cap = max(1, (8 << 20) // max(bytes_per_b, 1))
        batch_block = min(max(1, N // 2), vmem_cap) if N >= 2 else 1
        while N % batch_block:
            batch_block -= 1
    nb = batch_block
    assert N % nb == 0
    grid = (N // nb,)

    kernel = functools.partial(mha_kernel, heads=heads, head_size=head_size,
                               use_bf16_mxu=use_bf16_mxu)

    out = pl.pallas_call(
        kernel,
        out_shape=jax.ShapeDtypeStruct((N, q_len, embed), jnp.float32),
        grid_spec=pltpu.PrefetchScalarGridSpec(
            num_scalar_prefetch=0,
            grid=grid,
            in_specs=[
                pl.BlockSpec((nb, q_len, embed), lambda n: (n, 0, 0)),        # q
                pl.BlockSpec((nb, k_len, embed), lambda n: (n, 0, 0)),        # k
                pl.BlockSpec((nb, v_len, embed), lambda n: (n, 0, 0)),        # v
                pl.BlockSpec((nb, 1, q_len, k_len), lambda n: (n, 0, 0, 0)),  # additive mask
                pl.BlockSpec((embed, embed), lambda n: (0, 0)),               # WqT (scaled, block-diag)
                pl.BlockSpec((embed, embed), lambda n: (0, 0)),               # WkT (block-diag)
                pl.BlockSpec((embed, embed), lambda n: (0, 0)),               # WvT (block-diag)
                pl.BlockSpec((embed, embed), lambda n: (0, 0)),               # WfcT
                pl.BlockSpec((1, embed), lambda n: (0, 0)),                   # bq (scaled)
                pl.BlockSpec((1, embed), lambda n: (0, 0)),                   # bk
                pl.BlockSpec((1, embed), lambda n: (0, 0)),                   # bv
                pl.BlockSpec((1, embed), lambda n: (0, 0)),                   # bfc
            ],
            out_specs=pl.BlockSpec((nb, q_len, embed), lambda n: (n, 0, 0)),
            scratch_shapes=[pltpu.VMEM((nb, q_len, embed), jnp.float32)],
        ),
        compiler_params=pltpu.CompilerParams(dimension_semantics=("parallel",)),
    )(query, keys, values, amask, wqT, wkT, wvT, wfcT, bqT, bkT, bvT, bfcT)
    return out


def reference_forward(values, keys, query, mask, params, *, heads):
    """Pure-JAX transcription of the PyTorch forward, for verification."""
    wq, bq, wk, bk, wv, bv, wfc, bfc = params
    N, q_len, embed = query.shape
    k_len, v_len = keys.shape[1], values.shape[1]
    hs = embed // heads
    v = values.reshape(N, v_len, heads, hs) @ wv.T + bv
    k = keys.reshape(N, k_len, heads, hs) @ wk.T + bk
    q = query.reshape(N, q_len, heads, hs) @ wq.T + bq
    scores = jnp.einsum('nqhz,nkhz->nhqk', q, k)
    scores = jnp.where(mask == 0, -jnp.inf, scores)
    attn = jax.nn.softmax(scores / jnp.sqrt(jnp.float32(q_len)), axis=-1)
    out = jnp.einsum('nhqk,nkhz->nqhz', attn, v).reshape(N, q_len, heads * hs)
    return out @ wfc.T + bfc


if __name__ == "__main__":
    N, seq, embed, heads = 2, 8, 32, 4
    head_size = embed // heads

    key = jax.random.PRNGKey(0)
    ks = jax.random.split(key, 12)

    # deterministic synthetic parameters (nn.Linear shapes: W (out, in), b (out,))
    wq = jax.random.normal(ks[0], (head_size, head_size), jnp.float32) * 0.2
    bq = jax.random.normal(ks[1], (head_size,), jnp.float32) * 0.1
    wk = jax.random.normal(ks[2], (head_size, head_size), jnp.float32) * 0.2
    bk = jax.random.normal(ks[3], (head_size,), jnp.float32) * 0.1
    wv = jax.random.normal(ks[4], (head_size, head_size), jnp.float32) * 0.2
    bv = jax.random.normal(ks[5], (head_size,), jnp.float32) * 0.1
    wfc = jax.random.normal(ks[6], (embed, heads * head_size), jnp.float32) * 0.1
    bfc = jax.random.normal(ks[7], (embed,), jnp.float32) * 0.1
    params = (wq, bq, wk, bk, wv, bv, wfc, bfc)

    # inputs
    values = jax.random.normal(ks[8], (N, seq, embed), jnp.float32)
    keys_in = jax.random.normal(ks[9], (N, seq, embed), jnp.float32)
    query = jax.random.normal(ks[10], (N, seq, embed), jnp.float32)

    # causal mask (1 = attend, 0 = masked), broadcast over heads
    mask = jnp.tril(jnp.ones((seq, seq), jnp.int32))[None, None, :, :]
    mask = jnp.broadcast_to(mask, (N, 1, seq, seq))

    ref = reference_forward(values, keys_in, query, mask, params, heads=heads)

    # f32 MXU path (v5e / accuracy-first)
    out = multi_head_attention(values, keys_in, query, mask, params, heads=heads)
    out = jax.block_until_ready(out)
    assert out.shape == (N, seq, embed)
    assert jnp.allclose(out, ref, atol=5e-3, rtol=5e-3), "Pallas f32 output mismatch vs reference"

    # bf16-operand MXU path (v6e/v7x peak), f32 accumulation
    out_bf16 = multi_head_attention(values, keys_in, query, mask, params, heads=heads,
                                    use_bf16_mxu=True)
    out_bf16 = jax.block_until_ready(out_bf16)
    assert jnp.allclose(out_bf16, ref, atol=6e-2, rtol=6e-2), "Pallas bf16 output mismatch vs reference"

    print("KERNEL_OK")
</pallas_src>

<mosaic_0001>
module attributes {stable_mosaic.version = 11 : i64} {
  func.func @mha_kernel(%arg0: i32, %arg1: memref<1x8x32xf32, #tpu.memory_space<vmem>>, %arg2: memref<1x8x32xf32, #tpu.memory_space<vmem>>, %arg3: memref<1x8x32xf32, #tpu.memory_space<vmem>>, %arg4: memref<1x1x8x8xf32, #tpu.memory_space<vmem>>, %arg5: memref<32x32xf32, #tpu.memory_space<vmem>>, %arg6: memref<32x32xf32, #tpu.memory_space<vmem>>, %arg7: memref<32x32xf32, #tpu.memory_space<vmem>>, %arg8: memref<32x32xf32, #tpu.memory_space<vmem>>, %arg9: memref<1x32xf32, #tpu.memory_space<vmem>>, %arg10: memref<1x32xf32, #tpu.memory_space<vmem>>, %arg11: memref<1x32xf32, #tpu.memory_space<vmem>>, %arg12: memref<1x32xf32, #tpu.memory_space<vmem>>, %arg13: memref<1x8x32xf32, #tpu.memory_space<vmem>>, %arg14: memref<1x8x32xf32, #tpu.memory_space<vmem>>) attributes {dimension_semantics = [#tpu.dimension_semantics<parallel>], iteration_bounds = array<i64: 2>, scalar_prefetch = 0 : i64, scratch_operands = 1 : i64, tpu.core_type = #tpu.core_type<tc>, window_params = [{transform_indices = @transform_0, window_bounds = array<i64: 1, 8, 32>}, {transform_indices = @transform_1, window_bounds = array<i64: 1, 8, 32>}, {transform_indices = @transform_2, window_bounds = array<i64: 1, 8, 32>}, {transform_indices = @transform_3, window_bounds = array<i64: 1, 1, 8, 8>}, {pipeline_mode = #tpu.pipeline_mode<synchronous>, transform_indices = @transform_4, window_bounds = array<i64: 32, 32>}, {pipeline_mode = #tpu.pipeline_mode<synchronous>, transform_indices = @transform_5, window_bounds = array<i64: 32, 32>}, {pipeline_mode = #tpu.pipeline_mode<synchronous>, transform_indices = @transform_6, window_bounds = array<i64: 32, 32>}, {pipeline_mode = #tpu.pipeline_mode<synchronous>, transform_indices = @transform_7, window_bounds = array<i64: 32, 32>}, {pipeline_mode = #tpu.pipeline_mode<synchronous>, transform_indices = @transform_8, window_bounds = array<i64: 1, 32>}, {pipeline_mode = #tpu.pipeline_mode<synchronous>, transform_indices = @transform_9, window_bounds = array<i64: 1, 32>}, {pipeline_mode = #tpu.pipeline_mode<synchronous>, transform_indices = @transform_10, window_bounds = array<i64: 1, 32>}, {pipeline_mode = #tpu.pipeline_mode<synchronous>, transform_indices = @transform_11, window_bounds = array<i64: 1, 32>}, {transform_indices = @transform_12, window_bounds = array<i64: 1, 8, 32>}]} {
    %c0 = arith.constant 0 : index
    %c0_0 = arith.constant 0 : index
    %c0_1 = arith.constant 0 : index
    %0 = vector.load %arg1[%c0, %c0_0, %c0_1] : memref<1x8x32xf32, #tpu.memory_space<vmem>>, vector<1x8x32xf32>
    %1 = vector.shape_cast %0 : vector<1x8x32xf32> to vector<8x32xf32>
    %c0_2 = arith.constant 0 : index
    %c0_3 = arith.constant 0 : index
    %c0_4 = arith.constant 0 : index
    %2 = vector.load %arg2[%c0_2, %c0_3, %c0_4] : memref<1x8x32xf32, #tpu.memory_space<vmem>>, vector<1x8x32xf32>
    %3 = vector.shape_cast %2 : vector<1x8x32xf32> to vector<8x32xf32>
    %c0_5 = arith.constant 0 : index
    %c0_6 = arith.constant 0 : index
    %c0_7 = arith.constant 0 : index
    %4 = vector.load %arg3[%c0_5, %c0_6, %c0_7] : memref<1x8x32xf32, #tpu.memory_space<vmem>>, vector<1x8x32xf32>
    %5 = vector.shape_cast %4 : vector<1x8x32xf32> to vector<8x32xf32>
    %c0_8 = arith.constant 0 : index
    %c0_9 = arith.constant 0 : index
    %6 = vector.load %arg5[%c0_8, %c0_9] : memref<32x32xf32, #tpu.memory_space<vmem>>, vector<32x32xf32>
    %cst = arith.constant dense<0.000000e+00> : vector<8x32xf32>
    %7 = tpu.matmul %1, %6, %cst {dimension_numbers = #tpu.dot_dimension_numbers<[1], [0], [0], [1], [0, 0, 1, 1], [], []>} : vector<8x32xf32>, vector<32x32xf32>, vector<8x32xf32> -> vector<8x32xf32>
    %c0_10 = arith.constant 0 : index
    %c0_11 = arith.constant 0 : index
    %8 = vector.load %arg9[%c0_10, %c0_11] : memref<1x32xf32, #tpu.memory_space<vmem>>, vector<1x32xf32>
    %9 = vector.broadcast %8 : vector<1x32xf32> to vector<8x32xf32>
    %10 = arith.addf %7, %9 : vector<8x32xf32>
    %c0_12 = arith.constant 0 : index
    %c0_13 = arith.constant 0 : index
    %11 = vector.load %arg6[%c0_12, %c0_13] : memref<32x32xf32, #tpu.memory_space<vmem>>, vector<32x32xf32>
    %cst_14 = arith.constant dense<0.000000e+00> : vector<8x32xf32>
    %12 = tpu.matmul %3, %11, %cst_14 {dimension_numbers = #tpu.dot_dimension_numbers<[1], [0], [0], [1], [0, 0, 1, 1], [], []>} : vector<8x32xf32>, vector<32x32xf32>, vector<8x32xf32> -> vector<8x32xf32>
    %c0_15 = arith.constant 0 : index
    %c0_16 = arith.constant 0 : index
    %13 = vector.load %arg10[%c0_15, %c0_16] : memref<1x32xf32, #tpu.memory_space<vmem>>, vector<1x32xf32>
    %14 = vector.broadcast %13 : vector<1x32xf32> to vector<8x32xf32>
    %15 = arith.addf %12, %14 : vector<8x32xf32>
    %c0_17 = arith.constant 0 : index
    %c0_18 = arith.constant 0 : index
    %16 = vector.load %arg7[%c0_17, %c0_18] : memref<32x32xf32, #tpu.memory_space<vmem>>, vector<32x32xf32>
    %cst_19 = arith.constant dense<0.000000e+00> : vector<8x32xf32>
    %17 = tpu.matmul %5, %16, %cst_19 {dimension_numbers = #tpu.dot_dimension_numbers<[1], [0], [0], [1], [0, 0, 1, 1], [], []>} : vector<8x32xf32>, vector<32x32xf32>, vector<8x32xf32> -> vector<8x32xf32>
    %c0_20 = arith.constant 0 : index
    %c0_21 = arith.constant 0 : index
    %18 = vector.load %arg11[%c0_20, %c0_21] : memref<1x32xf32, #tpu.memory_space<vmem>>, vector<1x32xf32>
    %19 = vector.broadcast %18 : vector<1x32xf32> to vector<8x32xf32>
    %20 = arith.addf %17, %19 : vector<8x32xf32>
    %c0_22 = arith.constant 0 : index
    %c0_23 = arith.constant 0 : index
    %c0_24 = arith.constant 0 : index
    %c0_25 = arith.constant 0 : index
    %21 = vector.load %arg4[%c0_22, %c0_23, %c0_24, %c0_25] : memref<1x1x8x8xf32, #tpu.memory_space<vmem>>, vector<1x1x8x8xf32>
    %22 = vector.shape_cast %21 : vector<1x1x8x8xf32> to vector<1x8x8xf32>
    %23 = vector.extract_strided_slice %10 {offsets = [0, 0], sizes = [8, 8], strides = [1, 1]} : vector<8x32xf32> to vector<8x8xf32>
    %24 = vector.shape_cast %23 : vector<8x8xf32> to vector<1x8x8xf32>
    %25 = vector.extract_strided_slice %15 {offsets = [0, 0], sizes = [8, 8], strides = [1, 1]} : vector<8x32xf32> to vector<8x8xf32>
    %26 = vector.shape_cast %25 : vector<8x8xf32> to vector<1x8x8xf32>
    %27 = vector.extract_strided_slice %20 {offsets = [0, 0], sizes = [8, 8], strides = [1, 1]} : vector<8x32xf32> to vector<8x8xf32>
    %28 = vector.shape_cast %27 : vector<8x8xf32> to vector<1x8x8xf32>
    "tpu.trace_start"() <{level = 10 : i32, message = "bqz,bkz->bqk"}> : () -> ()
    %cst_26 = arith.constant dense<0.000000e+00> : vector<1x8x8xf32>
    %29 = tpu.matmul %24, %26, %cst_26 {dimension_numbers = #tpu.dot_dimension_numbers<[2], [2], [1], [1], [0, 0, 0, 1, 1, 1], [0], [0]>} : vector<1x8x8xf32>, vector<1x8x8xf32>, vector<1x8x8xf32> -> vector<1x8x8xf32>
    "tpu.trace_stop"() : () -> ()
    %30 = arith.addf %29, %22 : vector<1x8x8xf32>
    %cst_27 = arith.constant dense<0xFF800000> : vector<1x8xf32>
    %31 = vector.multi_reduction <maximumf>, %30, %cst_27 [2] : vector<1x8x8xf32> to vector<1x8xf32>
    %32 = vector.shape_cast %31 : vector<1x8xf32> to vector<1x8x1xf32>
    %33 = vector.broadcast %32 : vector<1x8x1xf32> to vector<1x8x8xf32>
    %34 = arith.subf %30, %33 : vector<1x8x8xf32>
    %35 = math.exp %34 : vector<1x8x8xf32>
    %cst_28 = arith.constant dense<0.000000e+00> : vector<1x8xf32>
    %36 = vector.multi_reduction <add>, %35, %cst_28 [2] : vector<1x8x8xf32> to vector<1x8xf32>
    %37 = vector.shape_cast %36 : vector<1x8xf32> to vector<1x8x1xf32>
    %38 = tpu.reciprocal %37 {approx = true} : vector<1x8x1xf32> -> vector<1x8x1xf32>
    %39 = vector.broadcast %38 : vector<1x8x1xf32> to vector<1x8x8xf32>
    %40 = arith.mulf %35, %39 : vector<1x8x8xf32>
    "tpu.trace_start"() <{level = 10 : i32, message = "bqk,bkz->bqz"}> : () -> ()
    %cst_29 = arith.constant dense<0.000000e+00> : vector<1x8x8xf32>
    %41 = tpu.matmul %40, %28, %cst_29 {dimension_numbers = #tpu.dot_dimension_numbers<[2], [1], [1], [2], [0, 0, 0, 1, 1, 2], [0], [0]>} : vector<1x8x8xf32>, vector<1x8x8xf32>, vector<1x8x8xf32> -> vector<1x8x8xf32>
    "tpu.trace_stop"() : () -> ()
    %c0_30 = arith.constant 0 : index
    %c0_31 = arith.constant 0 : index
    %c0_32 = arith.constant 0 : index
    %42 = vector.load %arg14[%c0_30, %c0_31, %c0_32] : memref<1x8x32xf32, #tpu.memory_space<vmem>>, vector<1x8x8xf32>
    tpu.vector_store %arg14[%c0_30, %c0_31, %c0_32], %41 {strides = array<i32>} : memref<1x8x32xf32, #tpu.memory_space<vmem>>, vector<1x8x8xf32>,
    %43 = vector.extract_strided_slice %10 {offsets = [0, 8], sizes = [8, 8], strides = [1, 1]} : vector<8x32xf32> to vector<8x8xf32>
    %44 = vector.shape_cast %43 : vector<8x8xf32> to vector<1x8x8xf32>
    %45 = vector.extract_strided_slice %15 {offsets = [0, 8], sizes = [8, 8], strides = [1, 1]} : vector<8x32xf32> to vector<8x8xf32>
    %46 = vector.shape_cast %45 : vector<8x8xf32> to vector<1x8x8xf32>
    %47 = vector.extract_strided_slice %20 {offsets = [0, 8], sizes = [8, 8], strides = [1, 1]} : vector<8x32xf32> to vector<8x8xf32>
    %48 = vector.shape_cast %47 : vector<8x8xf32> to vector<1x8x8xf32>
    "tpu.trace_start"() <{level = 10 : i32, message = "bqz,bkz->bqk"}> : () -> ()
    %cst_33 = arith.constant dense<0.000000e+00> : vector<1x8x8xf32>
    %49 = tpu.matmul %44, %46, %cst_33 {dimension_numbers = #tpu.dot_dimension_numbers<[2], [2], [1], [1], [0, 0, 0, 1, 1, 1], [0], [0]>} : vector<1x8x8xf32>, vector<1x8x8xf32>, vector<1x8x8xf32> -> vector<1x8x8xf32>
    "tpu.trace_stop"() : () -> ()
    %50 = arith.addf %49, %22 : vector<1x8x8xf32>
    %cst_34 = arith.constant dense<0xFF800000> : vector<1x8xf32>
    %51 = vector.multi_reduction <maximumf>, %50, %cst_34 [2] : vector<1x8x8xf32> to vector<1x8xf32>
    %52 = vector.shape_cast %51 : vector<1x8xf32> to vector<1x8x1xf32>
    %53 = vector.broadcast %52 : vector<1x8x1xf32> to vector<1x8x8xf32>
    %54 = arith.subf %50, %53 : vector<1x8x8xf32>
    %55 = math.exp %54 : vector<1x8x8xf32>
    %cst_35 = arith.constant dense<0.000000e+00> : vector<1x8xf32>
    %56 = vector.multi_reduction <add>, %55, %cst_35 [2] : vector<1x8x8xf32> to vector<1x8xf32>
    %57 = vector.shape_cast %56 : vector<1x8xf32> to vector<1x8x1xf32>
    %58 = tpu.reciprocal %57 {approx = true} : vector<1x8x1xf32> -> vector<1x8x1xf32>
    %59 = vector.broadcast %58 : vector<1x8x1xf32> to vector<1x8x8xf32>
    %60 = arith.mulf %55, %59 : vector<1x8x8xf32>
    "tpu.trace_start"() <{level = 10 : i32, message = "bqk,bkz->bqz"}> : () -> ()
    %cst_36 = arith.constant dense<0.000000e+00> : vector<1x8x8xf32>
    %61 = tpu.matmul %60, %48, %cst_36 {dimension_numbers = #tpu.dot_dimension_numbers<[2], [1], [1], [2], [0, 0, 0, 1, 1, 2], [0], [0]>} : vector<1x8x8xf32>, vector<1x8x8xf32>, vector<1x8x8xf32> -> vector<1x8x8xf32>
    "tpu.trace_stop"() : () -> ()
    %c0_37 = arith.constant 0 : index
    %c0_38 = arith.constant 0 : index
    %c8 = arith.constant 8 : index
    %62 = vector.load %arg14[%c0_37, %c0_38, %c8] : memref<1x8x32xf32, #tpu.memory_space<vmem>>, vector<1x8x8xf32>
    tpu.vector_store %arg14[%c0_37, %c0_38, %c8], %61 {strides = array<i32>} : memref<1x8x32xf32, #tpu.memory_space<vmem>>, vector<1x8x8xf32>,
    %63 = vector.extract_strided_slice %10 {offsets = [0, 16], sizes = [8, 8], strides = [1, 1]} : vector<8x32xf32> to vector<8x8xf32>
    %64 = vector.shape_cast %63 : vector<8x8xf32> to vector<1x8x8xf32>
    %65 = vector.extract_strided_slice %15 {offsets = [0, 16], sizes = [8, 8], strides = [1, 1]} : vector<8x32xf32> to vector<8x8xf32>
    %66 = vector.shape_cast %65 : vector<8x8xf32> to vector<1x8x8xf32>
    %67 = vector.extract_strided_slice %20 {offsets = [0, 16], sizes = [8, 8], strides = [1, 1]} : vector<8x32xf32> to vector<8x8xf32>
    %68 = vector.shape_cast %67 : vector<8x8xf32> to vector<1x8x8xf32>
    "tpu.trace_start"() <{level = 10 : i32, message = "bqz,bkz->bqk"}> : () -> ()
    %cst_39 = arith.constant dense<0.000000e+00> : vector<1x8x8xf32>
    %69 = tpu.matmul %64, %66, %cst_39 {dimension_numbers = #tpu.dot_dimension_numbers<[2], [2], [1], [1], [0, 0, 0, 1, 1, 1], [0], [0]>} : vector<1x8x8xf32>, vector<1x8x8xf32>, vector<1x8x8xf32> -> vector<1x8x8xf32>
    "tpu.trace_stop"() : () -> ()
    %70 = arith.addf %69, %22 : vector<1x8x8xf32>
    %cst_40 = arith.constant dense<0xFF800000> : vector<1x8xf32>
    %71 = vector.multi_reduction <maximumf>, %70, %cst_40 [2] : vector<1x8x8xf32> to vector<1x8xf32>
    %72 = vector.shape_cast %71 : vector<1x8xf32> to vector<1x8x1xf32>
    %73 = vector.broadcast %72 : vector<1x8x1xf32> to vector<1x8x8xf32>
    %74 = arith.subf %70, %73 : vector<1x8x8xf32>
    %75 = math.exp %74 : vector<1x8x8xf32>
    %cst_41 = arith.constant dense<0.000000e+00> : vector<1x8xf32>
    %76 = vector.multi_reduction <add>, %75, %cst_41 [2] : vector<1x8x8xf32> to vector<1x8xf32>
    %77 = vector.shape_cast %76 : vector<1x8xf32> to vector<1x8x1xf32>
    %78 = tpu.reciprocal %77 {approx = true} : vector<1x8x1xf32> -> vector<1x8x1xf32>
    %79 = vector.broadcast %78 : vector<1x8x1xf32> to vector<1x8x8xf32>
    %80 = arith.mulf %75, %79 : vector<1x8x8xf32>
    "tpu.trace_start"() <{level = 10 : i32, message = "bqk,bkz->bqz"}> : () -> ()
    %cst_42 = arith.constant dense<0.000000e+00> : vector<1x8x8xf32>
    %81 = tpu.matmul %80, %68, %cst_42 {dimension_numbers = #tpu.dot_dimension_numbers<[2], [1], [1], [2], [0, 0, 0, 1, 1, 2], [0], [0]>} : vector<1x8x8xf32>, vector<1x8x8xf32>, vector<1x8x8xf32> -> vector<1x8x8xf32>
    "tpu.trace_stop"() : () -> ()
    %c0_43 = arith.constant 0 : index
    %c0_44 = arith.constant 0 : index
    %c16 = arith.constant 16 : index
    %82 = vector.load %arg14[%c0_43, %c0_44, %c16] : memref<1x8x32xf32, #tpu.memory_space<vmem>>, vector<1x8x8xf32>
    tpu.vector_store %arg14[%c0_43, %c0_44, %c16], %81 {strides = array<i32>} : memref<1x8x32xf32, #tpu.memory_space<vmem>>, vector<1x8x8xf32>,
    %83 = vector.extract_strided_slice %10 {offsets = [0, 24], sizes = [8, 8], strides = [1, 1]} : vector<8x32xf32> to vector<8x8xf32>
    %84 = vector.shape_cast %83 : vector<8x8xf32> to vector<1x8x8xf32>
    %85 = vector.extract_strided_slice %15 {offsets = [0, 24], sizes = [8, 8], strides = [1, 1]} : vector<8x32xf32> to vector<8x8xf32>
    %86 = vector.shape_cast %85 : vector<8x8xf32> to vector<1x8x8xf32>
    %87 = vector.extract_strided_slice %20 {offsets = [0, 24], sizes = [8, 8], strides = [1, 1]} : vector<8x32xf32> to vector<8x8xf32>
    %88 = vector.shape_cast %87 : vector<8x8xf32> to vector<1x8x8xf32>
    "tpu.trace_start"() <{level = 10 : i32, message = "bqz,bkz->bqk"}> : () -> ()
    %cst_45 = arith.constant dense<0.000000e+00> : vector<1x8x8xf32>
    %89 = tpu.matmul %84, %86, %cst_45 {dimension_numbers = #tpu.dot_dimension_numbers<[2], [2], [1], [1], [0, 0, 0, 1, 1, 1], [0], [0]>} : vector<1x8x8xf32>, vector<1x8x8xf32>, vector<1x8x8xf32> -> vector<1x8x8xf32>
    "tpu.trace_stop"() : () -> ()
    %90 = arith.addf %89, %22 : vector<1x8x8xf32>
    %cst_46 = arith.constant dense<0xFF800000> : vector<1x8xf32>
    %91 = vector.multi_reduction <maximumf>, %90, %cst_46 [2] : vector<1x8x8xf32> to vector<1x8xf32>
    %92 = vector.shape_cast %91 : vector<1x8xf32> to vector<1x8x1xf32>
    %93 = vector.broadcast %92 : vector<1x8x1xf32> to vector<1x8x8xf32>
    %94 = arith.subf %90, %93 : vector<1x8x8xf32>
    %95 = math.exp %94 : vector<1x8x8xf32>
    %cst_47 = arith.constant dense<0.000000e+00> : vector<1x8xf32>
    %96 = vector.multi_reduction <add>, %95, %cst_47 [2] : vector<1x8x8xf32> to vector<1x8xf32>
    %97 = vector.shape_cast %96 : vector<1x8xf32> to vector<1x8x1xf32>
    %98 = tpu.reciprocal %97 {approx = true} : vector<1x8x1xf32> -> vector<1x8x1xf32>
    %99 = vector.broadcast %98 : vector<1x8x1xf32> to vector<1x8x8xf32>
    %100 = arith.mulf %95, %99 : vector<1x8x8xf32>
    "tpu.trace_start"() <{level = 10 : i32, message = "bqk,bkz->bqz"}> : () -> ()
    %cst_48 = arith.constant dense<0.000000e+00> : vector<1x8x8xf32>
    %101 = tpu.matmul %100, %88, %cst_48 {dimension_numbers = #tpu.dot_dimension_numbers<[2], [1], [1], [2], [0, 0, 0, 1, 1, 2], [0], [0]>} : vector<1x8x8xf32>, vector<1x8x8xf32>, vector<1x8x8xf32> -> vector<1x8x8xf32>
    "tpu.trace_stop"() : () -> ()
    %c0_49 = arith.constant 0 : index
    %c0_50 = arith.constant 0 : index
    %c24 = arith.constant 24 : index
    %102 = vector.load %arg14[%c0_49, %c0_50, %c24] : memref<1x8x32xf32, #tpu.memory_space<vmem>>, vector<1x8x8xf32>
    tpu.vector_store %arg14[%c0_49, %c0_50, %c24], %101 {strides = array<i32>} : memref<1x8x32xf32, #tpu.memory_space<vmem>>, vector<1x8x8xf32>,
    %c0_51 = arith.constant 0 : index
    %c0_52 = arith.constant 0 : index
    %c0_53 = arith.constant 0 : index
    %103 = vector.load %arg14[%c0_51, %c0_52, %c0_53] : memref<1x8x32xf32, #tpu.memory_space<vmem>>, vector<1x8x32xf32>
    %104 = vector.shape_cast %103 : vector<1x8x32xf32> to vector<8x32xf32>
    %c0_54 = arith.constant 0 : index
    %c0_55 = arith.constant 0 : index
    %105 = vector.load %arg8[%c0_54, %c0_55] : memref<32x32xf32, #tpu.memory_space<vmem>>, vector<32x32xf32>
    %cst_56 = arith.constant dense<0.000000e+00> : vector<8x32xf32>
    %106 = tpu.matmul %104, %105, %cst_56 {dimension_numbers = #tpu.dot_dimension_numbers<[1], [0], [0], [1], [0, 0, 1, 1], [], []>} : vector<8x32xf32>, vector<32x32xf32>, vector<8x32xf32> -> vector<8x32xf32>
    %c0_57 = arith.constant 0 : index
    %c0_58 = arith.constant 0 : index
    %107 = vector.load %arg12[%c0_57, %c0_58] : memref<1x32xf32, #tpu.memory_space<vmem>>, vector<1x32xf32>
    %108 = vector.broadcast %107 : vector<1x32xf32> to vector<8x32xf32>
    %109 = arith.addf %106, %108 : vector<8x32xf32>
    %110 = vector.shape_cast %109 : vector<8x32xf32> to vector<1x8x32xf32>
    %c0_59 = arith.constant 0 : index
    %c0_60 = arith.constant 0 : index
    %c0_61 = arith.constant 0 : index
    %111 = vector.load %arg13[%c0_59, %c0_60, %c0_61] : memref<1x8x32xf32, #tpu.memory_space<vmem>>, vector<1x8x32xf32>
    tpu.vector_store %arg13[%c0_59, %c0_60, %c0_61], %110 {strides = array<i32>} : memref<1x8x32xf32, #tpu.memory_space<vmem>>, vector<1x8x32xf32>,
    return
  }
  func.func @transform_0(%arg0: i32) -> (i32, i32, i32) {
    %c0_i32 = arith.constant 0 : i32
    %c0_i32_0 = arith.constant 0 : i32
    %c0_i32_1 = arith.constant 0 : i32
    return %arg0, %c0_i32, %c0_i32_0 : i32, i32, i32
  }
  func.func @transform_1(%arg0: i32) -> (i32, i32, i32) {
    %c0_i32 = arith.constant 0 : i32
    %c0_i32_0 = arith.constant 0 : i32
    %c0_i32_1 = arith.constant 0 : i32
    return %arg0, %c0_i32, %c0_i32_0 : i32, i32, i32
  }
  func.func @transform_2(%arg0: i32) -> (i32, i32, i32) {
    %c0_i32 = arith.constant 0 : i32
    %c0_i32_0 = arith.constant 0 : i32
    %c0_i32_1 = arith.constant 0 : i32
    return %arg0, %c0_i32, %c0_i32_0 : i32, i32, i32
  }
  func.func @transform_3(%arg0: i32) -> (i32, i32, i32, i32) {
    %c0_i32 = arith.constant 0 : i32
    %c0_i32_0 = arith.constant 0 : i32
    %c0_i32_1 = arith.constant 0 : i32
    %c0_i32_2 = arith.constant 0 : i32
    return %arg0, %c0_i32, %c0_i32_0, %c0_i32_1 : i32, i32, i32, i32
  }
  func.func @transform_4(%arg0: i32) -> (i32, i32) {
    %c0_i32 = arith.constant 0 : i32
    %c0_i32_0 = arith.constant 0 : i32
    %c0_i32_1 = arith.constant 0 : i32
    return %c0_i32, %c0_i32_0 : i32, i32
  }
  func.func @transform_5(%arg0: i32) -> (i32, i32) {
    %c0_i32 = arith.constant 0 : i32
    %c0_i32_0 = arith.constant 0 : i32
    %c0_i32_1 = arith.constant 0 : i32
    return %c0_i32, %c0_i32_0 : i32, i32
  }
  func.func @transform_6(%arg0: i32) -> (i32, i32) {
    %c0_i32 = arith.constant 0 : i32
    %c0_i32_0 = arith.constant 0 : i32
    %c0_i32_1 = arith.constant 0 : i32
    return %c0_i32, %c0_i32_0 : i32, i32
  }
  func.func @transform_7(%arg0: i32) -> (i32, i32) {
    %c0_i32 = arith.constant 0 : i32
    %c0_i32_0 = arith.constant 0 : i32
    %c0_i32_1 = arith.constant 0 : i32
    return %c0_i32, %c0_i32_0 : i32, i32
  }
  func.func @transform_8(%arg0: i32) -> (i32, i32) {
    %c0_i32 = arith.constant 0 : i32
    %c0_i32_0 = arith.constant 0 : i32
    %c0_i32_1 = arith.constant 0 : i32
    return %c0_i32, %c0_i32_0 : i32, i32
  }
  func.func @transform_9(%arg0: i32) -> (i32, i32) {
    %c0_i32 = arith.constant 0 : i32
    %c0_i32_0 = arith.constant 0 : i32
    %c0_i32_1 = arith.constant 0 : i32
    return %c0_i32, %c0_i32_0 : i32, i32
  }
  func.func @transform_10(%arg0: i32) -> (i32, i32) {
    %c0_i32 = arith.constant 0 : i32
    %c0_i32_0 = arith.constant 0 : i32
    %c0_i32_1 = arith.constant 0 : i32
    return %c0_i32, %c0_i32_0 : i32, i32
  }
  func.func @transform_11(%arg0: i32) -> (i32, i32) {
    %c0_i32 = arith.constant 0 : i32
    %c0_i32_0 = arith.constant 0 : i32
    %c0_i32_1 = arith.constant 0 : i32
    return %c0_i32, %c0_i32_0 : i32, i32
  }
  func.func @transform_12(%arg0: i32) -> (i32, i32, i32) {
    %c0_i32 = arith.constant 0 : i32
    %c0_i32_0 = arith.constant 0 : i32
    %c0_i32_1 = arith.constant 0 : i32
    return %arg0, %c0_i32, %c0_i32_0 : i32, i32, i32
  }
}

</mosaic_0001>

<llo_original>
// kernel: tpu_custom_call.1
$region0: #{tpu_custom_call.1}
  #allocation0 [shape = 'u32[]', space=smem, size = 0x4, offset = 0x4, fixed_abs, tag = 'smem constant byte address 0x4 - core index']
  #allocation1 [shape = 'u32[144,128]{1,0:T(1,128)}', space=vmem, size = 0x12000, scoped, tag = 'internal scratch']
  #allocation2 [shape = 'f32[1,8,32]{2,1,0:T(8,128)}', space=vmem, size = 0x1000, scoped, tag = 'scratch operand']
  %s0 = inlined_call_operand.hbm [shape: f32[2,8,32], index: 0, kind: input, shape index: {}]
  %s1 = inlined_call_operand.hbm [shape: f32[2,8,32], index: 1, kind: input, shape index: {}]
  %s2 = inlined_call_operand.hbm [shape: f32[2,8,32], index: 2, kind: input, shape index: {}]
  %s3 = inlined_call_operand.hbm [shape: f32[2,1,8,8], index: 3, kind: input, shape index: {}]
  %s4 = inlined_call_operand.hbm [shape: f32[32,32], index: 4, kind: input, shape index: {}]
  %s5 = inlined_call_operand.hbm [shape: f32[32,32], index: 5, kind: input, shape index: {}]
  %s6 = inlined_call_operand.hbm [shape: f32[32,32], index: 6, kind: input, shape index: {}]
  %s7 = inlined_call_operand.hbm [shape: f32[32,32], index: 7, kind: input, shape index: {}]
  %s8 = inlined_call_operand.vmem [shape: f32[1,32], index: 8, kind: input, shape index: {}]
  %s9 = inlined_call_operand.vmem [shape: f32[1,32], index: 9, kind: input, shape index: {}]
  %s10 = inlined_call_operand.vmem [shape: f32[1,32], index: 10, kind: input, shape index: {}]
  %s11 = inlined_call_operand.vmem [shape: f32[1,32], index: 11, kind: input, shape index: {}]
  %s12 = inlined_call_operand.hbm [shape: f32[2,8,32], index: 12, kind: output, shape index: {}]
  %s13 = sld [smem:[#allocation0]]
  $region113: #{tpu_custom_call.1} parent=0
    _
  %s15 = ssub.s32 1, %s13
  %s16 = scalar_select 0, %s15, %s13
  $region1: #{tpu_custom_call.1} parent=0
    #allocation3 [shape = 'u8[8192]{0}', space=vmem, size = 0x2000, scoped, tag = 'input window, operand 0']
    #allocation4 [shape = 's32[2]{0}', space=sflag, size = 0x8, scoped, tag = 'scoped memory for tpu_custom_call.1']
    #allocation5 [shape = 's32[2]{0}', space=sflag, size = 0x8, scoped, tag = 'scoped memory for tpu_custom_call.1']
    #allocation6 [shape = 'u8[8192]{0}', space=vmem, size = 0x2000, scoped, tag = 'input window, operand 1']
    #allocation7 [shape = 's32[2]{0}', space=sflag, size = 0x8, scoped, tag = 'scoped memory for tpu_custom_call.1']
    #allocation8 [shape = 'u8[8192]{0}', space=vmem, size = 0x2000, scoped, tag = 'input window, operand 2']
    #allocation9 [shape = 'u8[8192]{0}', space=vmem, size = 0x2000, scoped, tag = 'input window, operand 3']
    #allocation10 [shape = 's32[2]{0}', space=sflag, size = 0x8, scoped, tag = 'scoped memory for tpu_custom_call.1']
    #allocation11 [shape = 'u8[16384]{0}', space=vmem, size = 0x4000, scoped, tag = 'input window, operand 4, single buffered']
    #allocation12 [shape = 'u8[16384]{0}', space=vmem, size = 0x4000, scoped, tag = 'input window, operand 5, single buffered']
    #allocation13 [shape = 's32[1]{0}', space=sflag, size = 0x4, scoped, tag = 'scoped memory for tpu_custom_call.1']
    #allocation14 [shape = 'u8[16384]{0}', space=vmem, size = 0x4000, scoped, tag = 'input window, operand 6, single buffered']
    #allocation15 [shape = 'u8[16384]{0}', space=vmem, size = 0x4000, scoped, tag = 'input window, operand 7, single buffered']
    #allocation16 [shape = 's32[1]{0}', space=sflag, size = 0x4, scoped, tag = 'scoped memory for tpu_custom_call.1']
    #allocation17 [shape = 'u8[8192]{0}', space=vmem, size = 0x2000, scoped, tag = 'output window, operand 0']
    %17 = vsyncpa [#allocation4], 0
    %s18 = scalar_lea.sflag [#allocation4], 1
    %19 = vsyncpa %s18, 0
    %20 = vsyncpa [#allocation7], 0
    %s21 = scalar_lea.sflag [#allocation7], 1
    %22 = vsyncpa %s21, 0
    %23 = vsyncpa [#allocation10], 0
    %s24 = scalar_lea.sflag [#allocation10], 1
    %25 = vsyncpa %s24, 0
    %26 = vsyncpa [#allocation13], 0
    %27 = vsyncpa [#allocation16], 0
    %28 = vsyncpa [#allocation5], 0
    %s29 = scalar_lea.sflag [#allocation5], 1
    %30 = vsyncpa %s29, 0
    loop: start=0, step=1, limit=4
    $region2: #{tpu_custom_call.1} parent=1 // loop_pre_header
      _
    $region3: #{tpu_custom_call.1} parent=1 // loop_header
      %s32 = sphi 0, %s36
      %p33 = scmp.ge.s32.totalorder %s32, 4
      %s42 = sphi 0, %s44
      %s45 = sphi 0, %s42
      %s46 = sphi 0, %s45
      %s62 = sphi 0, %s46
      %s68 = sphi 0, %s70
      %s71 = sphi 0, %s68
      %s72 = sphi 0, %s71
      %s88 = sphi 0, %s72
      %s94 = sphi 0, %s96
      %s97 = sphi 0, %s94
      %s98 = sphi 0, %s97
      %s114 = sphi 0, %s98
      %s120 = sphi 0, %s122
      %s123 = sphi 0, %s120
      %s124 = sphi 0, %s123
      %s140 = sphi 0, %s124
      %s144 = sphi 0, %s144
      %s146 = sphi 0, %s144
      %s147 = sphi 0, %s146
      %s161 = sphi 0, %s147
      %s165 = sphi 0, %s165
      %s167 = sphi 0, %s165
      %s168 = sphi 0, %s167
      %s182 = sphi 0, %s168
      %s186 = sphi 0, %s186
      %s188 = sphi 0, %s186
      %s189 = sphi 0, %s188
      %s203 = sphi 0, %s189
      %s207 = sphi 0, %s207
      %s209 = sphi 0, %s207
      %s210 = sphi 0, %s209
      %s224 = sphi 0, %s210
      %s228 = sphi 0, %s228
      %s230 = sphi 0, %s228
      %s231 = sphi 0, %s230
      %s245 = sphi 0, %s231
      %s249 = sphi 0, %s249
      %s251 = sphi 0, %s249
      %s252 = sphi 0, %s251
      %s266 = sphi 0, %s252
      %s270 = sphi 0, %s270
      %s272 = sphi 0, %s270
      %s273 = sphi 0, %s272
      %s287 = sphi 0, %s273
      %s291 = sphi 0, %s291
      %s293 = sphi 0, %s291
      %s294 = sphi 0, %s293
      %s308 = sphi 0, %s294
      %s314 = sphi 0, %s316
      %s317 = sphi 0, %s314
      %s318 = sphi 0, %s317
      %s334 = sphi 0, %s318
    $region4: #{tpu_custom_call.1} parent=1 // loop_header_branch
      %35 = sbr.rel (%p33) target = $region8
    $region5: #{tpu_custom_call.1} parent=1 // loop_body
      %s37 = ssub.s32 %s32, 1
      %s38 = ssub.s32 %s32, 2
      %s39 = sadd.s32 %s32, 1
      %s40 = ssub.s32 %s32, %s39
      %p41 = scmp.eq.s32.totalorder %s40, 0
      %s43 = sadd.s32 %s42, 1
      %s44 = scalar_select %p41, %s42, %s43
      %p47 = pneg %p41
      %p48 = scmp.eq.s32.totalorder %s32, 1
      %p49 = por %p47, %p48
      %p50 = scmp.ne.s32.totalorder %s42, %s45
      %p51 = scmp.eq.s32.totalorder %s32, 0
      %p52 = por %p50, %p51
      %p53 = scmp.ne.s32.totalorder %s42, %s45
      %p54 = scmp.eq.s32.totalorder %s37, 1
      %p55 = por %p53, %p54
      %p56 = scmp.ne.s32.totalorder %s45, %s46
      %p57 = scmp.eq.s32.totalorder %s37, 0
      %p58 = por %p56, %p57
      %p59 = scmp.ne.s32.totalorder %s45, %s46
      %p60 = scmp.eq.s32.totalorder %s38, 1
      %p61 = por %p59, %p60
      %p63 = scmp.ne.s32.totalorder %s46, %s62
      %p64 = scmp.eq.s32.totalorder %s38, 0
      %p65 = por %p63, %p64
      %s66 = ssub.s32 %s32, %s39
      %p67 = scmp.eq.s32.totalorder %s66, 0
      %s69 = sadd.s32 %s68, 1
      %s70 = scalar_select %p67, %s68, %s69
      %p73 = pneg %p67
      %p74 = scmp.eq.s32.totalorder %s32, 1
      %p75 = por %p73, %p74
      %p76 = scmp.ne.s32.totalorder %s68, %s71
      %p77 = scmp.eq.s32.totalorder %s32, 0
      %p78 = por %p76, %p77
      %p79 = scmp.ne.s32.totalorder %s68, %s71
      %p80 = scmp.eq.s32.totalorder %s37, 1
      %p81 = por %p79, %p80
      %p82 = scmp.ne.s32.totalorder %s71, %s72
      %p83 = scmp.eq.s32.totalorder %s37, 0
      %p84 = por %p82, %p83
      %p85 = scmp.ne.s32.totalorder %s71, %s72
      %p86 = scmp.eq.s32.totalorder %s38, 1
      %p87 = por %p85, %p86
      %p89 = scmp.ne.s32.totalorder %s72, %s88
      %p90 = scmp.eq.s32.totalorder %s38, 0
      %p91 = por %p89, %p90
      %s92 = ssub.s32 %s32, %s39
      %p93 = scmp.eq.s32.totalorder %s92, 0
      %s95 = sadd.s32 %s94, 1
      %s96 = scalar_select %p93, %s94, %s95
      %p99 = pneg %p93
      %p100 = scmp.eq.s32.totalorder %s32, 1
      %p101 = por %p99, %p100
      %p102 = scmp.ne.s32.totalorder %s94, %s97
      %p103 = scmp.eq.s32.totalorder %s32, 0
      %p104 = por %p102, %p103
      %p105 = scmp.ne.s32.totalorder %s94, %s97
      %p106 = scmp.eq.s32.totalorder %s37, 1
      %p107 = por %p105, %p106
      %p108 = scmp.ne.s32.totalorder %s97, %s98
      %p109 = scmp.eq.s32.totalorder %s37, 0
      %p110 = por %p108, %p109
      %p111 = scmp.ne.s32.totalorder %s97, %s98
      %p112 = scmp.eq.s32.totalorder %s38, 1
      %p113 = por %p111, %p112
      %p115 = scmp.ne.s32.totalorder %s98, %s114
      %p116 = scmp.eq.s32.totalorder %s38, 0
      %p117 = por %p115, %p116
      %s118 = ssub.s32 %s32, %s39
      %p119 = scmp.eq.s32.totalorder %s118, 0
      %s121 = sadd.s32 %s120, 1
      %s122 = scalar_select %p119, %s120, %s121
      %p125 = pneg %p119
      %p126 = scmp.eq.s32.totalorder %s32, 1
      %p127 = por %p125, %p126
      %p128 = scmp.ne.s32.totalorder %s120, %s123
      %p129 = scmp.eq.s32.totalorder %s32, 0
      %p130 = por %p128, %p129
      %p131 = scmp.ne.s32.totalorder %s120, %s123
      %p132 = scmp.eq.s32.totalorder %s37, 1
      %p133 = por %p131, %p132
      %p134 = scmp.ne.s32.totalorder %s123, %s124
      %p135 = scmp.eq.s32.totalorder %s37, 0
      %p136 = por %p134, %p135
      %p137 = scmp.ne.s32.totalorder %s123, %s124
      %p138 = scmp.eq.s32.totalorder %s38, 1
      %p139 = por %p137, %p138
      %p141 = scmp.ne.s32.totalorder %s124, %s140
      %p142 = scmp.eq.s32.totalorder %s38, 0
      %p143 = por %p141, %p142
      %s145 = sadd.s32 %s144, 1
      %p148 = scmp.eq.s32.totalorder %s32, 1
      %p149 = scmp.ne.s32.totalorder %s144, %s146
      %p150 = scmp.eq.s32.totalorder %s32, 0
      %p151 = por %p149, %p150
      %p152 = scmp.ne.s32.totalorder %s144, %s146
      %p153 = scmp.eq.s32.totalorder %s37, 1
      %p154 = por %p152, %p153
      %p155 = scmp.ne.s32.totalorder %s146, %s147
      %p156 = scmp.eq.s32.totalorder %s37, 0
      %p157 = por %p155, %p156
      %p158 = scmp.ne.s32.totalorder %s146, %s147
      %p159 = scmp.eq.s32.totalorder %s38, 1
      %p160 = por %p158, %p159
      %p162 = scmp.ne.s32.totalorder %s147, %s161
      %p163 = scmp.eq.s32.totalorder %s38, 0
      %p164 = por %p162, %p163
      %s166 = sadd.s32 %s165, 1
      %p169 = scmp.eq.s32.totalorder %s32, 1
      %p170 = scmp.ne.s32.totalorder %s165, %s167
      %p171 = scmp.eq.s32.totalorder %s32, 0
      %p172 = por %p170, %p171
      %p173 = scmp.ne.s32.totalorder %s165, %s167
      %p174 = scmp.eq.s32.totalorder %s37, 1
      %p175 = por %p173, %p174
      %p176 = scmp.ne.s32.totalorder %s167, %s168
      %p177 = scmp.eq.s32.totalorder %s37, 0
      %p178 = por %p176, %p177
      %p179 = scmp.ne.s32.totalorder %s167, %s168
      %p180 = scmp.eq.s32.totalorder %s38, 1
      %p181 = por %p179, %p180
      %p183 = scmp.ne.s32.totalorder %s168, %s182
      %p184 = scmp.eq.s32.totalorder %s38, 0
      %p185 = por %p183, %p184
      %s187 = sadd.s32 %s186, 1
      %p190 = scmp.eq.s32.totalorder %s32, 1
      %p191 = scmp.ne.s32.totalorder %s186, %s188
      %p192 = scmp.eq.s32.totalorder %s32, 0
      %p193 = por %p191, %p192
      %p194 = scmp.ne.s32.totalorder %s186, %s188
      %p195 = scmp.eq.s32.totalorder %s37, 1
      %p196 = por %p194, %p195
      %p197 = scmp.ne.s32.totalorder %s188, %s189
      %p198 = scmp.eq.s32.totalorder %s37, 0
      %p199 = por %p197, %p198
      %p200 = scmp.ne.s32.totalorder %s188, %s189
      %p201 = scmp.eq.s32.totalorder %s38, 1
      %p202 = por %p200, %p201
      %p204 = scmp.ne.s32.totalorder %s189, %s203
      %p205 = scmp.eq.s32.totalorder %s38, 0
      %p206 = por %p204, %p205
      %s208 = sadd.s32 %s207, 1
      %p211 = scmp.eq.s32.totalorder %s32, 1
      %p212 = scmp.ne.s32.totalorder %s207, %s209
      %p213 = scmp.eq.s32.totalorder %s32, 0
      %p214 = por %p212, %p213
      %p215 = scmp.ne.s32.totalorder %s207, %s209
      %p216 = scmp.eq.s32.totalorder %s37, 1
      %p217 = por %p215, %p216
      %p218 = scmp.ne.s32.totalorder %s209, %s210
      %p219 = scmp.eq.s32.totalorder %s37, 0
      %p220 = por %p218, %p219
      %p221 = scmp.ne.s32.totalorder %s209, %s210
      %p222 = scmp.eq.s32.totalorder %s38, 1
      %p223 = por %p221, %p222
      %p225 = scmp.ne.s32.totalorder %s210, %s224
      %p226 = scmp.eq.s32.totalorder %s38, 0
      %p227 = por %p225, %p226
      %s229 = sadd.s32 %s228, 1
      %p232 = scmp.eq.s32.totalorder %s32, 1
      %p233 = scmp.ne.s32.totalorder %s228, %s230
      %p234 = scmp.eq.s32.totalorder %s32, 0
      %p235 = por %p233, %p234
      %p236 = scmp.ne.s32.totalorder %s228, %s230
      %p237 = scmp.eq.s32.totalorder %s37, 1
      %p238 = por %p236, %p237
      %p239 = scmp.ne.s32.totalorder %s230, %s231
      %p240 = scmp.eq.s32.totalorder %s37, 0
      %p241 = por %p239, %p240
      %p242 = scmp.ne.s32.totalorder %s230, %s231
      %p243 = scmp.eq.s32.totalorder %s38, 1
      %p244 = por %p242, %p243
      %p246 = scmp.ne.s32.totalorder %s231, %s245
      %p247 = scmp.eq.s32.totalorder %s38, 0
      %p248 = por %p246, %p247
      %s250 = sadd.s32 %s249, 1
      %p253 = scmp.eq.s32.totalorder %s32, 1
      %p254 = scmp.ne.s32.totalorder %s249, %s251
      %p255 = scmp.eq.s32.totalorder %s32, 0
      %p256 = por %p254, %p255
      %p257 = scmp.ne.s32.totalorder %s249, %s251
      %p258 = scmp.eq.s32.totalorder %s37, 1
      %p259 = por %p257, %p258
      %p260 = scmp.ne.s32.totalorder %s251, %s252
      %p261 = scmp.eq.s32.totalorder %s37, 0
      %p262 = por %p260, %p261
      %p263 = scmp.ne.s32.totalorder %s251, %s252
      %p264 = scmp.eq.s32.totalorder %s38, 1
      %p265 = por %p263, %p264
      %p267 = scmp.ne.s32.totalorder %s252, %s266
      %p268 = scmp.eq.s32.totalorder %s38, 0
      %p269 = por %p267, %p268
      %s271 = sadd.s32 %s270, 1
      %p274 = scmp.eq.s32.totalorder %s32, 1
      %p275 = scmp.ne.s32.totalorder %s270, %s272
      %p276 = scmp.eq.s32.totalorder %s32, 0
      %p277 = por %p275, %p276
      %p278 = scmp.ne.s32.totalorder %s270, %s272
      %p279 = scmp.eq.s32.totalorder %s37, 1
      %p280 = por %p278, %p279
      %p281 = scmp.ne.s32.totalorder %s272, %s273
      %p282 = scmp.eq.s32.totalorder %s37, 0
      %p283 = por %p281, %p282
      %p284 = scmp.ne.s32.totalorder %s272, %s273
      %p285 = scmp.eq.s32.totalorder %s38, 1
      %p286 = por %p284, %p285
      %p288 = scmp.ne.s32.totalorder %s273, %s287
      %p289 = scmp.eq.s32.totalorder %s38, 0
      %p290 = por %p288, %p289
      %s292 = sadd.s32 %s291, 1
      %p295 = scmp.eq.s32.totalorder %s32, 1
      %p296 = scmp.ne.s32.totalorder %s291, %s293
      %p297 = scmp.eq.s32.totalorder %s32, 0
      %p298 = por %p296, %p297
      %p299 = scmp.ne.s32.totalorder %s291, %s293
      %p300 = scmp.eq.s32.totalorder %s37, 1
      %p301 = por %p299, %p300
      %p302 = scmp.ne.s32.totalorder %s293, %s294
      %p303 = scmp.eq.s32.totalorder %s37, 0
      %p304 = por %p302, %p303
      %p305 = scmp.ne.s32.totalorder %s293, %s294
      %p306 = scmp.eq.s32.totalorder %s38, 1
      %p307 = por %p305, %p306
      %p309 = scmp.ne.s32.totalorder %s294, %s308
      %p310 = scmp.eq.s32.totalorder %s38, 0
      %p311 = por %p309, %p310
      %s312 = ssub.s32 %s32, %s39
      %p313 = scmp.eq.s32.totalorder %s312, 0
      %s315 = sadd.s32 %s314, 1
      %s316 = scalar_select %p313, %s314, %s315
      %p319 = pneg %p313
      %p320 = scmp.eq.s32.totalorder %s32, 1
      %p321 = por %p319, %p320
      %p322 = scmp.ne.s32.totalorder %s314, %s317
      %p323 = scmp.eq.s32.totalorder %s32, 0
      %p324 = por %p322, %p323
      %p325 = scmp.ne.s32.totalorder %s314, %s317
      %p326 = scmp.eq.s32.totalorder %s37, 1
      %p327 = por %p325, %p326
      %p328 = scmp.ne.s32.totalorder %s317, %s318
      %p329 = scmp.eq.s32.totalorder %s37, 0
      %p330 = por %p328, %p329
      %p331 = scmp.ne.s32.totalorder %s317, %s318
      %p332 = scmp.eq.s32.totalorder %s38, 1
      %p333 = por %p331, %p332
      %p335 = scmp.ne.s32.totalorder %s318, %s334
      %p336 = scmp.eq.s32.totalorder %s38, 0
      %p337 = por %p335, %p336
      %p338 = scmp.le.s32.totalorder 1, %s32
      %p339 = scmp.lt.s32.totalorder %s32, 3
      %p340 = pnand %p338, %p339
      %p341 = pneg %p340
      // Predicated region
      $region9: #{tpu_custom_call.1} parent=5 // pred_check
        _
      $region10: #{tpu_custom_call.1} parent=5 // pred_check_branch
        %343 = sbr.rel (%p340) target = $region12
      $region11: #{tpu_custom_call.1} parent=5 // pred_region
        %s344 = ssub.s32 %s32, 1
        // Predicated region
        $region13: #{tpu_custom_call.1} parent=11 // pred_check
          %p345 = pneg %p157
        $region14: #{tpu_custom_call.1} parent=11 // pred_check_branch
          %347 = sbr.rel (%p345) target = $region16
        $region15: #{tpu_custom_call.1} parent=11 // pred_region
          %s349 = ssub.s32 512, 512
          %350 = vsyncadd [#allocation10], %s349
          %s351 = sshll.u32 [#allocation11], 4
          %s352 = int_to_ptr.vmem [resolvable:$true] %s351
          %357 = dma.hbm_to_vmem [thread:$0]  %s4, 512, %s352, [#allocation10], 128, 128, 8
        $region16: #{tpu_custom_call.1} parent=11 // pred_fallthru
          _
        // Predicated region
        $region17: #{tpu_custom_call.1} parent=11 // pred_check
          %p358 = pneg %p178
        $region18: #{tpu_custom_call.1} parent=11 // pred_check_branch
          %360 = sbr.rel (%p358) target = $region20
        $region19: #{tpu_custom_call.1} parent=11 // pred_region
          %s362 = ssub.s32 512, 512
          %363 = vsyncadd [#allocation13], %s362
          %s364 = sshll.u32 [#allocation12], 4
          %s365 = int_to_ptr.vmem [resolvable:$true] %s364
          %370 = dma.hbm_to_vmem [thread:$0]  %s5, 512, %s365, [#allocation13], 128, 128, 8
        $region20: #{tpu_custom_call.1} parent=11 // pred_fallthru
          _
        // Predicated region
        $region21: #{tpu_custom_call.1} parent=11 // pred_check
          %p371 = pneg %p199
        $region22: #{tpu_custom_call.1} parent=11 // pred_check_branch
          %373 = sbr.rel (%p371) target = $region24
        $region23: #{tpu_custom_call.1} parent=11 // pred_region
          %s375 = ssub.s32 512, 512
          %376 = vsyncadd [#allocation13], %s375
          %s377 = sshll.u32 [#allocation14], 4
          %s378 = int_to_ptr.vmem [resolvable:$true] %s377
          %383 = dma.hbm_to_vmem [thread:$0]  %s6, 512, %s378, [#allocation13], 128, 128, 8
        $region24: #{tpu_custom_call.1} parent=11 // pred_fallthru
          _
        // Predicated region
        $region25: #{tpu_custom_call.1} parent=11 // pred_check
          %p384 = pneg %p220
        $region26: #{tpu_custom_call.1} parent=11 // pred_check_branch
          %386 = sbr.rel (%p384) target = $region28
        $region27: #{tpu_custom_call.1} parent=11 // pred_region
          %s388 = ssub.s32 512, 512
          %389 = vsyncadd [#allocation16], %s388
          %s390 = sshll.u32 [#allocation15], 4
          %s391 = int_to_ptr.vmem [resolvable:$true] %s390
          %396 = dma.hbm_to_vmem [thread:$0]  %s7, 512, %s391, [#allocation16], 128, 128, 8
        $region28: #{tpu_custom_call.1} parent=11 // pred_fallthru
          _
        // Predicated region
        $region29: #{tpu_custom_call.1} parent=11 // pred_check
          %p397 = pneg %p241
        $region30: #{tpu_custom_call.1} parent=11 // pred_check_branch
          %399 = sbr.rel (%p397) target = $region32
        $region31: #{tpu_custom_call.1} parent=11 // pred_region
          _
        $region32: #{tpu_custom_call.1} parent=11 // pred_fallthru
          _
        // Predicated region
        $region33: #{tpu_custom_call.1} parent=11 // pred_check
          %p400 = pneg %p262
        $region34: #{tpu_custom_call.1} parent=11 // pred_check_branch
          %402 = sbr.rel (%p400) target = $region36
        $region35: #{tpu_custom_call.1} parent=11 // pred_region
          _
        $region36: #{tpu_custom_call.1} parent=11 // pred_fallthru
          _
        // Predicated region
        $region37: #{tpu_custom_call.1} parent=11 // pred_check
          %p403 = pneg %p283
        $region38: #{tpu_custom_call.1} parent=11 // pred_check_branch
          %405 = sbr.rel (%p403) target = $region40
        $region39: #{tpu_custom_call.1} parent=11 // pred_region
          _
        $region40: #{tpu_custom_call.1} parent=11 // pred_fallthru
          _
        // Predicated region
        $region41: #{tpu_custom_call.1} parent=11 // pred_check
          %p406 = pneg %p304
        $region42: #{tpu_custom_call.1} parent=11 // pred_check_branch
          %408 = sbr.rel (%p406) target = $region44
        $region43: #{tpu_custom_call.1} parent=11 // pred_region
          _
        $region44: #{tpu_custom_call.1} parent=11 // pred_fallthru
          _
      $region12: #{tpu_custom_call.1} parent=5 // pred_fallthru
        _
      %p409 = scmp.lt.s32.totalorder %s32, 2
      // Predicated region
      $region45: #{tpu_custom_call.1} parent=5 // pred_check
        %p410 = pneg %p409
      $region46: #{tpu_custom_call.1} parent=5 // pred_check_branch
        %412 = sbr.rel (%p410) target = $region48
      $region47: #{tpu_custom_call.1} parent=5 // pred_region
        // Predicated region
        $region49: #{tpu_custom_call.1} parent=47 // pred_check
          %p413 = pneg %p52
        $region50: #{tpu_custom_call.1} parent=47 // pred_check_branch
          %415 = sbr.rel (%p413) target = $region52
        $region51: #{tpu_custom_call.1} parent=47 // pred_region
          %s416 = sand.u32 %s42, 1
          %s417 = scalar_lea.sflag [#allocation4], %s416
          %s418 = sand.u32 %s42, 1
          %s419 = smul.addr %s418, 8
          %s420 = scalar_lea.vmem [#allocation3], %s419
          %s422 = ssub.s32 128, 128
          %423 = vsyncadd %s417, %s422
          %s424 = smul.addr %s32, 128
          %s425 = scalar_lea.hbm %s0, %s424
          %s427 = sshll.u32 %s420, 4
          %s428 = int_to_ptr.vmem [resolvable:$true] %s427
          %430 = dma.hbm_to_vmem [thread:$0]  %s425, 128, %s428, %s417
        $region52: #{tpu_custom_call.1} parent=47 // pred_fallthru
          _
        // Predicated region
        $region53: #{tpu_custom_call.1} parent=47 // pred_check
          %p431 = pneg %p78
        $region54: #{tpu_custom_call.1} parent=47 // pred_check_branch
          %433 = sbr.rel (%p431) target = $region56
        $region55: #{tpu_custom_call.1} parent=47 // pred_region
          %s434 = sand.u32 %s32, 1
          %s435 = scalar_lea.sflag [#allocation7], %s434
          %s436 = sand.u32 %s68, 1
          %s437 = smul.addr %s436, 8
          %s438 = scalar_lea.vmem [#allocation6], %s437
          %s440 = ssub.s32 128, 128
          %441 = vsyncadd %s435, %s440
          %s442 = smul.addr %s32, 128
          %s443 = scalar_lea.hbm %s1, %s442
          %s445 = sshll.u32 %s438, 4
          %s446 = int_to_ptr.vmem [resolvable:$true] %s445
          %448 = dma.hbm_to_vmem [thread:$0]  %s443, 128, %s446, %s435
        $region56: #{tpu_custom_call.1} parent=47 // pred_fallthru
          _
        // Predicated region
        $region57: #{tpu_custom_call.1} parent=47 // pred_check
          %p449 = pneg %p104
        $region58: #{tpu_custom_call.1} parent=47 // pred_check_branch
          %451 = sbr.rel (%p449) target = $region60
        $region59: #{tpu_custom_call.1} parent=47 // pred_region
          %s452 = sand.u32 %s32, 1
          %s453 = scalar_lea.sflag [#allocation7], %s452
          %s454 = sand.u32 %s94, 1
          %s455 = smul.addr %s454, 8
          %s456 = scalar_lea.vmem [#allocation8], %s455
          %s458 = ssub.s32 128, 128
          %459 = vsyncadd %s453, %s458
          %s460 = smul.addr %s32, 128
          %s461 = scalar_lea.hbm %s2, %s460
          %s463 = sshll.u32 %s456, 4
          %s464 = int_to_ptr.vmem [resolvable:$true] %s463
          %466 = dma.hbm_to_vmem [thread:$0]  %s461, 128, %s464, %s453
        $region60: #{tpu_custom_call.1} parent=47 // pred_fallthru
          _
        // Predicated region
        $region61: #{tpu_custom_call.1} parent=47 // pred_check
          %p467 = pneg %p130
        $region62: #{tpu_custom_call.1} parent=47 // pred_check_branch
          %469 = sbr.rel (%p467) target = $region64
        $region63: #{tpu_custom_call.1} parent=47 // pred_region
          %s470 = sand.u32 %s32, 1
          %s471 = scalar_lea.sflag [#allocation10], %s470
          %s472 = sand.u32 %s120, 1
          %s473 = smul.addr %s472, 8
          %s474 = scalar_lea.vmem [#allocation9], %s473
          %s476 = ssub.s32 128, 128
          %477 = vsyncadd %s471, %s476
          %s478 = smul.addr %s32, 128
          %s479 = scalar_lea.hbm %s3, %s478
          %s481 = sshll.u32 %s474, 4
          %s482 = int_to_ptr.vmem [resolvable:$true] %s481
          %484 = dma.hbm_to_vmem [thread:$0]  %s479, 128, %s482, %s471
        $region64: #{tpu_custom_call.1} parent=47 // pred_fallthru
          _
      $region48: #{tpu_custom_call.1} parent=5 // pred_fallthru
        _
      %p485 = scmp.le.s32.totalorder 1, %s32
      %p486 = scmp.lt.s32.totalorder %s32, 3
      %p487 = pnand %p485, %p486
      %p488 = pneg %p487
      // Predicated region
      $region65: #{tpu_custom_call.1} parent=5 // pred_check
        _
      $region66: #{tpu_custom_call.1} parent=5 // pred_check_branch
        %490 = sbr.rel (%p487) target = $region68
      $region67: #{tpu_custom_call.1} parent=5 // pred_region
        %s491 = ssub.s32 %s32, 1
        %s492 = sand.u32 %s45, 1
        %s493 = scalar_lea.sflag [#allocation4], %s492
        %s494 = sand.u32 %s45, 1
        %s495 = smul.addr %s494, 8
        %s496 = scalar_lea.vmem [#allocation3], %s495
        // Predicated region
        $region69: #{tpu_custom_call.1} parent=67 // pred_check
          %p497 = pneg %p58
        $region70: #{tpu_custom_call.1} parent=67 // pred_check_branch
          %499 = sbr.rel (%p497) target = $region72
        $region71: #{tpu_custom_call.1} parent=67 // pred_region
          %500 = dma.done %s493, 128
        $region72: #{tpu_custom_call.1} parent=67 // pred_fallthru
          _
        %s501 = sand.u32 %s37, 1
        %s502 = scalar_lea.sflag [#allocation7], %s501
        %s503 = sand.u32 %s71, 1
        %s504 = smul.addr %s503, 8
        %s505 = scalar_lea.vmem [#allocation6], %s504
        // Predicated region
        $region73: #{tpu_custom_call.1} parent=67 // pred_check
          %p506 = pneg %p84
        $region74: #{tpu_custom_call.1} parent=67 // pred_check_branch
          %508 = sbr.rel (%p506) target = $region76
        $region75: #{tpu_custom_call.1} parent=67 // pred_region
          %509 = dma.done %s502, 128
        $region76: #{tpu_custom_call.1} parent=67 // pred_fallthru
          _
        %s510 = sand.u32 %s37, 1
        %s511 = scalar_lea.sflag [#allocation7], %s510
        %s512 = sand.u32 %s97, 1
        %s513 = smul.addr %s512, 8
        %s514 = scalar_lea.vmem [#allocation8], %s513
        // Predicated region
        $region77: #{tpu_custom_call.1} parent=67 // pred_check
          %p515 = pneg %p110
        $region78: #{tpu_custom_call.1} parent=67 // pred_check_branch
          %517 = sbr.rel (%p515) target = $region80
        $region79: #{tpu_custom_call.1} parent=67 // pred_region
          %518 = dma.done %s511, 128
        $region80: #{tpu_custom_call.1} parent=67 // pred_fallthru
          _
        %s519 = sand.u32 %s37, 1
        %s520 = scalar_lea.sflag [#allocation10], %s519
        %s521 = sand.u32 %s123, 1
        %s522 = smul.addr %s521, 8
        %s523 = scalar_lea.vmem [#allocation9], %s522
        // Predicated region
        $region81: #{tpu_custom_call.1} parent=67 // pred_check
          %p524 = pneg %p136
        $region82: #{tpu_custom_call.1} parent=67 // pred_check_branch
          %526 = sbr.rel (%p524) target = $region84
        $region83: #{tpu_custom_call.1} parent=67 // pred_region
          %527 = dma.done %s520, 128
        $region84: #{tpu_custom_call.1} parent=67 // pred_fallthru
          _
        // Predicated region
        $region85: #{tpu_custom_call.1} parent=67 // pred_check
          %p528 = pneg %p157
        $region86: #{tpu_custom_call.1} parent=67 // pred_check_branch
          %530 = sbr.rel (%p528) target = $region88
        $region87: #{tpu_custom_call.1} parent=67 // pred_region
          %531 = dma.done [#allocation10], 512
        $region88: #{tpu_custom_call.1} parent=67 // pred_fallthru
          _
        // Predicated region
        $region89: #{tpu_custom_call.1} parent=67 // pred_check
          %p532 = pneg %p178
        $region90: #{tpu_custom_call.1} parent=67 // pred_check_branch
          %534 = sbr.rel (%p532) target = $region92
        $region91: #{tpu_custom_call.1} parent=67 // pred_region
          %535 = dma.done [#allocation13], 512
        $region92: #{tpu_custom_call.1} parent=67 // pred_fallthru
          _
        // Predicated region
        $region93: #{tpu_custom_call.1} parent=67 // pred_check
          %p536 = pneg %p199
        $region94: #{tpu_custom_call.1} parent=67 // pred_check_branch
          %538 = sbr.rel (%p536) target = $region96
        $region95: #{tpu_custom_call.1} parent=67 // pred_region
          %539 = dma.done [#allocation13], 512
        $region96: #{tpu_custom_call.1} parent=67 // pred_fallthru
          _
        // Predicated region
        $region97: #{tpu_custom_call.1} parent=67 // pred_check
          %p540 = pneg %p220
        $region98: #{tpu_custom_call.1} parent=67 // pred_check_branch
          %542 = sbr.rel (%p540) target = $region100
        $region99: #{tpu_custom_call.1} parent=67 // pred_region
          %543 = dma.done [#allocation16], 512
        $region100: #{tpu_custom_call.1} parent=67 // pred_fallthru
          _
        %s544 = sand.u32 %s45, 1
        %s545 = scalar_lea.sflag [#allocation4], %s544
        %s546 = sand.u32 %s45, 1
        %s547 = smul.addr %s546, 8
        %s548 = scalar_lea.vmem [#allocation3], %s547
        %p549 = pneg %p58
        %p550 = pneg %p55
        %s551 = sand.u32 %s37, 1
        %s552 = scalar_lea.sflag [#allocation7], %s551
        %s553 = sand.u32 %s71, 1
        %s554 = smul.addr %s553, 8
        %s555 = scalar_lea.vmem [#allocation6], %s554
        %p556 = pneg %p84
        %p557 = pneg %p81
        %s558 = sand.u32 %s37, 1
        %s559 = scalar_lea.sflag [#allocation7], %s558
        %s560 = sand.u32 %s97, 1
        %s561 = smul.addr %s560, 8
        %s562 = scalar_lea.vmem [#allocation8], %s561
        %p563 = pneg %p110
        %p564 = pneg %p107
        %s565 = sand.u32 %s37, 1
        %s566 = scalar_lea.sflag [#allocation10], %s565
        %s567 = sand.u32 %s123, 1
        %s568 = smul.addr %s567, 8
        %s569 = scalar_lea.vmem [#allocation9], %s568
        %p570 = pneg %p136
        %p571 = pneg %p133
        %p572 = pneg %p157
        %p573 = pneg %p154
        %p574 = pneg %p178
        %p575 = pneg %p175
        %p576 = pneg %p199
        %p577 = pneg %p196
        %p578 = pneg %p220
        %p579 = pneg %p217
        %p580 = pneg %p241
        %p581 = pneg %p238
        %p582 = pneg %p262
        %p583 = pneg %p259
        %p584 = pneg %p283
        %p585 = pneg %p280
        %p586 = pneg %p304
        %p587 = pneg %p301
        %p588 = pneg %p330
        %p589 = pneg %p327
        %s590 = sand.u32 %s317, 1
        %s591 = scalar_lea.sflag [#allocation5], %s590
        %s592 = sand.u32 %s317, 1
        %s593 = smul.addr %s592, 8
        %s594 = scalar_lea.vmem [#allocation17], %s593
        %v595 = vld [vmem:[%s496] sm:$0xff]
        %v596 = vld [vmem:[%s505] sm:$0xff]
        %v597 = vld [vmem:[%s514] sm:$0xff]
        %v598 = vld [vmem:[#allocation11] sm:$0xff]
        %v599 = vld [vmem:[#allocation11 + $0x8] sm:$0xff]
        %v600 = vld [vmem:[#allocation11 + $0x10] sm:$0xff]
        %v601 = vld [vmem:[#allocation11 + $0x18] sm:$0xff]
        %v602 = vld [vmem:[%s8] sm:$0x1]
        %v604 = vlaneseq
        %v605 = vshrl.u32 %v604, 7
        %v606 = vsub.s32 0, %v605
        %v607 = vrot.slane %v602, %v606
        %vm609 = vcmask 261120
        %v611 = vsel %vm609, %v595, 0
        %613 = vmatprep.subr.mxu0 0.0
        %614 = vmatpush1.msra.mxu0 %v598
        %615 = vmatprep.subr.mxu0 0.0
        %616 = vmatpush1.msra.mxu0 %v599
        %617 = vmatprep.subr.mxu0 0.0
        %618 = vmatpush1.msra.mxu0 %v600
        %619 = vmatprep.subr.mxu0 0.0
        %620 = vmatpush1.msra.mxu0 %v601
        %621 = vmatprep.subr.mxu0 0.0
        %622 = vmatpush1.msra.mxu0 0.0
        %623 = vmatprep.subr.mxu0 0.0
        %624 = vmatpush1.msra.mxu0 0.0
        %625 = vmatprep.subr.mxu0 0.0
        %626 = vmatpush1.msra.mxu0 0.0
        %627 = vmatprep.subr.mxu0 0.0
        %628 = vmatpush1.msra.mxu0 0.0
        %629 = vmatprep.subr.mxu0 0.0
        %630 = vmatpush1.msra.mxu0 0.0
        %631 = vmatprep.subr.mxu0 0.0
        %632 = vmatpush1.msra.mxu0 0.0
        %633 = vmatprep.subr.mxu0 0.0
        %634 = vmatpush1.msra.mxu0 0.0
        %635 = vmatprep.subr.mxu0 0.0
        %636 = vmatpush1.msra.mxu0 0.0
        %637 = vmatprep.subr.mxu0 0.0
        %638 = vmatpush1.msra.mxu0 0.0
        %639 = vmatprep.subr.mxu0 0.0
        %640 = vmatpush1.msra.mxu0 0.0
        %641 = vmatprep.subr.mxu0 0.0
        %642 = vmatpush1.msra.mxu0 0.0
        %643 = vmatprep.subr.mxu0 0.0
        %644 = vmatpush1.msra.mxu0 0.0
        %645 = vmatprep.subr.mxu0 0.0
        %646 = vmatpush1.msra.mxu0 0.0
        %647 = vmatprep.subr.mxu0 0.0
        %648 = vmatpush1.msra.mxu0 0.0
        %649 = vmatprep.subr.mxu0 0.0
        %650 = vmatpush1.msra.mxu0 0.0
        %651 = vmatprep.subr.mxu0 0.0
        %652 = vmatpush1.msra.mxu0 0.0
        %653 = vmatprep.subr.mxu0 0.0
        %654 = vmatpush1.msra.mxu0 0.0
        %655 = vmatprep.subr.mxu0 0.0
        %656 = vmatpush1.msra.mxu0 0.0
        %657 = vmatprep.subr.mxu0 0.0
        %658 = vmatpush1.msra.mxu0 0.0
        %659 = vmatprep.subr.mxu0 0.0
        %660 = vmatpush1.msra.mxu0 0.0
        %661 = vmatprep.subr.mxu0 0.0
        %662 = vmatpush1.msra.mxu0 0.0
        %663 = vmatprep.subr.mxu0 0.0
        %664 = vmatpush1.msra.mxu0 0.0
        %665 = vmatprep.subr.mxu0 0.0
        %666 = vmatpush1.msra.mxu0 0.0
        %667 = vmatprep.subr.mxu0 0.0
        %668 = vmatpush1.msra.mxu0 0.0
        %669 = vmatprep.subr.mxu0 0.0
        %670 = vmatpush1.msra.mxu0 0.0
        %671 = vmatprep.subr.mxu0 0.0
        %672 = vmatpush1.msra.mxu0 0.0
        %673 = vmatprep.subr.mxu0 0.0
        %674 = vmatpush1.msra.mxu0 0.0
        %675 = vmatprep.subr.mxu0 0.0
        %676 = vmatpush1.msra.mxu0 0.0
        %677 = vmatprep.mubr.f32.mxu0 0.0
        %678 = vmatmul.mubr.f32.gmra.mrb[0].mxu0 %v611
        %v679 = vpop.f32.mrb[0].mxu0
        %v680 = vadd.f32 %v607, %v679
        %v681 = vpop.f32.mrb[0].mxu0
        %682 = vdwg.mxu0
        %v683 = vld [vmem:[#allocation12] sm:$0xff]
        %v684 = vld [vmem:[#allocation12 + $0x8] sm:$0xff]
        %v685 = vld [vmem:[#allocation12 + $0x10] sm:$0xff]
        %v686 = vld [vmem:[#allocation12 + $0x18] sm:$0xff]
        %v687 = vld [vmem:[%s9] sm:$0x1]
        %v689 = vlaneseq
        %v690 = vshrl.u32 %v689, 7
        %v691 = vsub.s32 0, %v690
        %v692 = vrot.slane %v687, %v691
        %v695 = vsel %vm609, %v596, 0
        %697 = vmatprep.subr.mxu0 0.0
        %698 = vmatpush1.msra.mxu0 %v683
        %699 = vmatprep.subr.mxu0 0.0
        %700 = vmatpush1.msra.mxu0 %v684
        %701 = vmatprep.subr.mxu0 0.0
        %702 = vmatpush1.msra.mxu0 %v685
        %703 = vmatprep.subr.mxu0 0.0
        %704 = vmatpush1.msra.mxu0 %v686
        %705 = vmatprep.subr.mxu0 0.0
        %706 = vmatpush1.msra.mxu0 0.0
        %707 = vmatprep.subr.mxu0 0.0
        %708 = vmatpush1.msra.mxu0 0.0
        %709 = vmatprep.subr.mxu0 0.0
        %710 = vmatpush1.msra.mxu0 0.0
        %711 = vmatprep.subr.mxu0 0.0
        %712 = vmatpush1.msra.mxu0 0.0
        %713 = vmatprep.subr.mxu0 0.0
        %714 = vmatpush1.msra.mxu0 0.0
        %715 = vmatprep.subr.mxu0 0.0
        %716 = vmatpush1.msra.mxu0 0.0
        %717 = vmatprep.subr.mxu0 0.0
        %718 = vmatpush1.msra.mxu0 0.0
        %719 = vmatprep.subr.mxu0 0.0
        %720 = vmatpush1.msra.mxu0 0.0
        %721 = vmatprep.subr.mxu0 0.0
        %722 = vmatpush1.msra.mxu0 0.0
        %723 = vmatprep.subr.mxu0 0.0
        %724 = vmatpush1.msra.mxu0 0.0
        %725 = vmatprep.subr.mxu0 0.0
        %726 = vmatpush1.msra.mxu0 0.0
        %727 = vmatprep.subr.mxu0 0.0
        %728 = vmatpush1.msra.mxu0 0.0
        %729 = vmatprep.subr.mxu0 0.0
        %730 = vmatpush1.msra.mxu0 0.0
        %731 = vmatprep.subr.mxu0 0.0
        %732 = vmatpush1.msra.mxu0 0.0
        %733 = vmatprep.subr.mxu0 0.0
        %734 = vmatpush1.msra.mxu0 0.0
        %735 = vmatprep.subr.mxu0 0.0
        %736 = vmatpush1.msra.mxu0 0.0
        %737 = vmatprep.subr.mxu0 0.0
        %738 = vmatpush1.msra.mxu0 0.0
        %739 = vmatprep.subr.mxu0 0.0
        %740 = vmatpush1.msra.mxu0 0.0
        %741 = vmatprep.subr.mxu0 0.0
        %742 = vmatpush1.msra.mxu0 0.0
        %743 = vmatprep.subr.mxu0 0.0
        %744 = vmatpush1.msra.mxu0 0.0
        %745 = vmatprep.subr.mxu0 0.0
        %746 = vmatpush1.msra.mxu0 0.0
        %747 = vmatprep.subr.mxu0 0.0
        %748 = vmatpush1.msra.mxu0 0.0
        %749 = vmatprep.subr.mxu0 0.0
        %750 = vmatpush1.msra.mxu0 0.0
        %751 = vmatprep.subr.mxu0 0.0
        %752 = vmatpush1.msra.mxu0 0.0
        %753 = vmatprep.subr.mxu0 0.0
        %754 = vmatpush1.msra.mxu0 0.0
        %755 = vmatprep.subr.mxu0 0.0
        %756 = vmatpush1.msra.mxu0 0.0
        %757 = vmatprep.subr.mxu0 0.0
        %758 = vmatpush1.msra.mxu0 0.0
        %759 = vmatprep.subr.mxu0 0.0
        %760 = vmatpush1.msra.mxu0 0.0
        %761 = vmatprep.mubr.f32.mxu0 0.0
        %762 = vmatmul.mubr.f32.gmra.mrb[0].mxu0 %v695
        %v763 = vpop.f32.mrb[0].mxu0
        %v764 = vadd.f32 %v692, %v763
        %v765 = vpop.f32.mrb[0].mxu0
        %766 = vdwg.mxu0
        %v767 = vld [vmem:[#allocation14] sm:$0xff]
        %v768 = vld [vmem:[#allocation14 + $0x8] sm:$0xff]
        %v769 = vld [vmem:[#allocation14 + $0x10] sm:$0xff]
        %v770 = vld [vmem:[#allocation14 + $0x18] sm:$0xff]
        %v771 = vld [vmem:[%s10] sm:$0x1]
        %v773 = vlaneseq
        %v774 = vshrl.u32 %v773, 7
        %v775 = vsub.s32 0, %v774
        %v776 = vrot.slane %v771, %v775
        %v779 = vsel %vm609, %v597, 0
        %781 = vmatprep.subr.mxu0 0.0
        %782 = vmatpush1.msra.mxu0 %v767
        %783 = vmatprep.subr.mxu0 0.0
        %784 = vmatpush1.msra.mxu0 %v768
        %785 = vmatprep.subr.mxu0 0.0
        %786 = vmatpush1.msra.mxu0 %v769
        %787 = vmatprep.subr.mxu0 0.0
        %788 = vmatpush1.msra.mxu0 %v770
        %789 = vmatprep.subr.mxu0 0.0
        %790 = vmatpush1.msra.mxu0 0.0
        %791 = vmatprep.subr.mxu0 0.0
        %792 = vmatpush1.msra.mxu0 0.0
        %793 = vmatprep.subr.mxu0 0.0
        %794 = vmatpush1.msra.mxu0 0.0
        %795 = vmatprep.subr.mxu0 0.0
        %796 = vmatpush1.msra.mxu0 0.0
        %797 = vmatprep.subr.mxu0 0.0
        %798 = vmatpush1.msra.mxu0 0.0
        %799 = vmatprep.subr.mxu0 0.0
        %800 = vmatpush1.msra.mxu0 0.0
        %801 = vmatprep.subr.mxu0 0.0
        %802 = vmatpush1.msra.mxu0 0.0
        %803 = vmatprep.subr.mxu0 0.0
        %804 = vmatpush1.msra.mxu0 0.0
        %805 = vmatprep.subr.mxu0 0.0
        %806 = vmatpush1.msra.mxu0 0.0
        %807 = vmatprep.subr.mxu0 0.0
        %808 = vmatpush1.msra.mxu0 0.0
        %809 = vmatprep.subr.mxu0 0.0
        %810 = vmatpush1.msra.mxu0 0.0
        %811 = vmatprep.subr.mxu0 0.0
        %812 = vmatpush1.msra.mxu0 0.0
        %813 = vmatprep.subr.mxu0 0.0
        %814 = vmatpush1.msra.mxu0 0.0
        %815 = vmatprep.subr.mxu0 0.0
        %816 = vmatpush1.msra.mxu0 0.0
        %817 = vmatprep.subr.mxu0 0.0
        %818 = vmatpush1.msra.mxu0 0.0
        %819 = vmatprep.subr.mxu0 0.0
        %820 = vmatpush1.msra.mxu0 0.0
        %821 = vmatprep.subr.mxu0 0.0
        %822 = vmatpush1.msra.mxu0 0.0
        %823 = vmatprep.subr.mxu0 0.0
        %824 = vmatpush1.msra.mxu0 0.0
        %825 = vmatprep.subr.mxu0 0.0
        %826 = vmatpush1.msra.mxu0 0.0
        %827 = vmatprep.subr.mxu0 0.0
        %828 = vmatpush1.msra.mxu0 0.0
        %829 = vmatprep.subr.mxu0 0.0
        %830 = vmatpush1.msra.mxu0 0.0
        %831 = vmatprep.subr.mxu0 0.0
        %832 = vmatpush1.msra.mxu0 0.0
        %833 = vmatprep.subr.mxu0 0.0
        %834 = vmatpush1.msra.mxu0 0.0
        %835 = vmatprep.subr.mxu0 0.0
        %836 = vmatpush1.msra.mxu0 0.0
        %837 = vmatprep.subr.mxu0 0.0
        %838 = vmatpush1.msra.mxu0 0.0
        %839 = vmatprep.subr.mxu0 0.0
        %840 = vmatpush1.msra.mxu0 0.0
        %841 = vmatprep.subr.mxu0 0.0
        %842 = vmatpush1.msra.mxu0 0.0
        %843 = vmatprep.subr.mxu0 0.0
        %844 = vmatpush1.msra.mxu0 0.0
        %845 = vmatprep.mubr.f32.mxu0 0.0
        %846 = vmatmul.mubr.f32.gmra.mrb[0].mxu0 %v779
        %v847 = vpop.f32.mrb[0].mxu0
        %v848 = vadd.f32 %v776, %v847
        %v849 = vpop.f32.mrb[0].mxu0
        %850 = vdwg.mxu0
        %v851 = vld [vmem:[%s523] sm:$0xff]
        %vm852 = vcmask 64512
        %v854 = vsel %vm852, %v680, 0
        %v857 = vsel %vm852, %v764, 0
        %859 = vmatprep.subr.mxu0 0.0
        %860 = vmatpush1.xpose.msra.mxu0 %v857
        %861 = vmatprep.subr.mxu0 0.0
        %862 = vmatpush1.xpose.msra.mxu0 0.0
        %863 = vmatprep.subr.mxu0 0.0
        %864 = vmatpush1.xpose.msra.mxu0 0.0
        %865 = vmatprep.subr.mxu0 0.0
        %866 = vmatpush1.xpose.msra.mxu0 0.0
        %867 = vmatprep.subr.mxu0 0.0
        %868 = vmatpush1.xpose.msra.mxu0 0.0
        %869 = vmatprep.subr.mxu0 0.0
        %870 = vmatpush1.xpose.msra.mxu0 0.0
        %871 = vmatprep.subr.mxu0 0.0
        %872 = vmatpush1.xpose.msra.mxu0 0.0
        %873 = vmatprep.subr.mxu0 0.0
        %874 = vmatpush1.xpose.msra.mxu0 0.0
        %875 = vmatprep.subr.mxu0 0.0
        %876 = vmatpush1.xpose.msra.mxu0 0.0
        %877 = vmatprep.subr.mxu0 0.0
        %878 = vmatpush1.xpose.msra.mxu0 0.0
        %879 = vmatprep.subr.mxu0 0.0
        %880 = vmatpush1.xpose.msra.mxu0 0.0
        %881 = vmatprep.subr.mxu0 0.0
        %882 = vmatpush1.xpose.msra.mxu0 0.0
        %883 = vmatprep.subr.mxu0 0.0
        %884 = vmatpush1.xpose.msra.mxu0 0.0
        %885 = vmatprep.subr.mxu0 0.0
        %886 = vmatpush1.xpose.msra.mxu0 0.0
        %887 = vmatprep.subr.mxu0 0.0
        %888 = vmatpush1.xpose.msra.mxu0 0.0
        %889 = vmatprep.subr.mxu0 0.0
        %890 = vmatpush1.xpose.msra.mxu0 0.0
        %891 = vmatprep.subr.mxu0 0.0
        %892 = vmatpush1.xpose.msra.mxu0 0.0
        %893 = vmatprep.subr.mxu0 0.0
        %894 = vmatpush1.xpose.msra.mxu0 0.0
        %895 = vmatprep.subr.mxu0 0.0
        %896 = vmatpush1.xpose.msra.mxu0 0.0
        %897 = vmatprep.subr.mxu0 0.0
        %898 = vmatpush1.xpose.msra.mxu0 0.0
        %899 = vmatprep.subr.mxu0 0.0
        %900 = vmatpush1.xpose.msra.mxu0 0.0
        %901 = vmatprep.subr.mxu0 0.0
        %902 = vmatpush1.xpose.msra.mxu0 0.0
        %903 = vmatprep.subr.mxu0 0.0
        %904 = vmatpush1.xpose.msra.mxu0 0.0
        %905 = vmatprep.subr.mxu0 0.0
        %906 = vmatpush1.xpose.msra.mxu0 0.0
        %907 = vmatprep.subr.mxu0 0.0
        %908 = vmatpush1.xpose.msra.mxu0 0.0
        %909 = vmatprep.subr.mxu0 0.0
        %910 = vmatpush1.xpose.msra.mxu0 0.0
        %911 = vmatprep.subr.mxu0 0.0
        %912 = vmatpush1.xpose.msra.mxu0 0.0
        %913 = vmatprep.subr.mxu0 0.0
        %914 = vmatpush1.xpose.msra.mxu0 0.0
        %915 = vmatprep.subr.mxu0 0.0
        %916 = vmatpush1.xpose.msra.mxu0 0.0
        %917 = vmatprep.subr.mxu0 0.0
        %918 = vmatpush1.xpose.msra.mxu0 0.0
        %919 = vmatprep.subr.mxu0 0.0
        %920 = vmatpush1.xpose.msra.mxu0 0.0
        %921 = vmatprep.subr.mxu0 0.0
        %922 = vmatpush1.xpose.msra.mxu0 0.0
        %923 = vmatprep.mubr.f32.mxu0 0.0
        %924 = vmatmul.mubr.f32.gmra.mrb[0].mxu0 %v854
        %v925 = vpop.f32.mrb[0].mxu0
        %v926 = vadd.f32 %v851, %v925
        %v927 = vpop.f32.mrb[0].mxu0
        %928 = vdwg.mxu0
        %v929 = vsel %vm852, %v926, -inf
        %930 = vmax.xlane.f32.xlu0 %v929
        %v931 = vpop.xlane.xlu0 %930
        %v932 = vsub.f32 %v926, %v931
        %v933 = vmul.f32 %v932, 1.442695
        %v934 = vpow.pop %v933
        %v935 = vsel %vm852, %v934, 0.0
        %936 = vadd.xlane.f32.xlu0 %v935
        %v937 = vpop.xlane.xlu0 %936
        %v938 = vrcp.pop %v937
        %v939 = vmul.f32 %v934, %v938
        %v941 = vsel %vm852, %v939, 0
        %943 = vmatprep.subr.mxu0 0.0
        %944 = vmatpush1.msra.mxu0 %v848
        %945 = vmatprep.subr.mxu0 0.0
        %946 = vmatpush1.msra.mxu0 0.0
        %947 = vmatprep.subr.mxu0 0.0
        %948 = vmatpush1.msra.mxu0 0.0
        %949 = vmatprep.subr.mxu0 0.0
        %950 = vmatpush1.msra.mxu0 0.0
        %951 = vmatprep.subr.mxu0 0.0
        %952 = vmatpush1.msra.mxu0 0.0
        %953 = vmatprep.subr.mxu0 0.0
        %954 = vmatpush1.msra.mxu0 0.0
        %955 = vmatprep.subr.mxu0 0.0
        %956 = vmatpush1.msra.mxu0 0.0
        %957 = vmatprep.subr.mxu0 0.0
        %958 = vmatpush1.msra.mxu0 0.0
        %959 = vmatprep.subr.mxu0 0.0
        %960 = vmatpush1.msra.mxu0 0.0
        %961 = vmatprep.subr.mxu0 0.0
        %962 = vmatpush1.msra.mxu0 0.0
        %963 = vmatprep.subr.mxu0 0.0
        %964 = vmatpush1.msra.mxu0 0.0
        %965 = vmatprep.subr.mxu0 0.0
        %966 = vmatpush1.msra.mxu0 0.0
        %967 = vmatprep.subr.mxu0 0.0
        %968 = vmatpush1.msra.mxu0 0.0
        %969 = vmatprep.subr.mxu0 0.0
        %970 = vmatpush1.msra.mxu0 0.0
        %971 = vmatprep.subr.mxu0 0.0
        %972 = vmatpush1.msra.mxu0 0.0
        %973 = vmatprep.subr.mxu0 0.0
        %974 = vmatpush1.msra.mxu0 0.0
        %975 = vmatprep.subr.mxu0 0.0
        %976 = vmatpush1.msra.mxu0 0.0
        %977 = vmatprep.subr.mxu0 0.0
        %978 = vmatpush1.msra.mxu0 0.0
        %979 = vmatprep.subr.mxu0 0.0
        %980 = vmatpush1.msra.mxu0 0.0
        %981 = vmatprep.subr.mxu0 0.0
        %982 = vmatpush1.msra.mxu0 0.0
        %983 = vmatprep.subr.mxu0 0.0
        %984 = vmatpush1.msra.mxu0 0.0
        %985 = vmatprep.subr.mxu0 0.0
        %986 = vmatpush1.msra.mxu0 0.0
        %987 = vmatprep.subr.mxu0 0.0
        %988 = vmatpush1.msra.mxu0 0.0
        %989 = vmatprep.subr.mxu0 0.0
        %990 = vmatpush1.msra.mxu0 0.0
        %991 = vmatprep.subr.mxu0 0.0
        %992 = vmatpush1.msra.mxu0 0.0
        %993 = vmatprep.subr.mxu0 0.0
        %994 = vmatpush1.msra.mxu0 0.0
        %995 = vmatprep.subr.mxu0 0.0
        %996 = vmatpush1.msra.mxu0 0.0
        %997 = vmatprep.subr.mxu0 0.0
        %998 = vmatpush1.msra.mxu0 0.0
        %999 = vmatprep.subr.mxu0 0.0
        %1000 = vmatpush1.msra.mxu0 0.0
        %1001 = vmatprep.subr.mxu0 0.0
        %1002 = vmatpush1.msra.mxu0 0.0
        %1003 = vmatprep.subr.mxu0 0.0
        %1004 = vmatpush1.msra.mxu0 0.0
        %1005 = vmatprep.subr.mxu0 0.0
        %1006 = vmatpush1.msra.mxu0 0.0
        %1007 = vmatprep.mubr.f32.mxu0 0.0
        %1008 = vmatmul.mubr.f32.gmra.mrb[0].mxu0 %v941
        %v1009 = vpop.f32.mrb[0].mxu0
        %v1010 = vadd.f32 0.0, %v1009
        %v1011 = vpop.f32.mrb[0].mxu0
        %1012 = vdwg.mxu0
        %1013 = vst.msk [vmem:[#allocation2] sm:$0xff] %vm852, %v1010
        %1014 = vrot.lane.b32.xlu0 %v680, 120
        %v1015 = vpop.permute.xlu0 %1014
        %1016 = vrot.lane.b32.xlu0 %v764, 120
        %v1017 = vpop.permute.xlu0 %1016
        %v1018 = vsel %vm852, %v1015, 0
        %v1020 = vsel %vm852, %v1017, 0
        %1022 = vmatprep.subr.mxu0 0.0
        %1023 = vmatpush1.xpose.msra.mxu0 %v1020
        %1024 = vmatprep.subr.mxu0 0.0
        %1025 = vmatpush1.xpose.msra.mxu0 0.0
        %1026 = vmatprep.subr.mxu0 0.0
        %1027 = vmatpush1.xpose.msra.mxu0 0.0
        %1028 = vmatprep.subr.mxu0 0.0
        %1029 = vmatpush1.xpose.msra.mxu0 0.0
        %1030 = vmatprep.subr.mxu0 0.0
        %1031 = vmatpush1.xpose.msra.mxu0 0.0
        %1032 = vmatprep.subr.mxu0 0.0
        %1033 = vmatpush1.xpose.msra.mxu0 0.0
        %1034 = vmatprep.subr.mxu0 0.0
        %1035 = vmatpush1.xpose.msra.mxu0 0.0
        %1036 = vmatprep.subr.mxu0 0.0
        %1037 = vmatpush1.xpose.msra.mxu0 0.0
        %1038 = vmatprep.subr.mxu0 0.0
        %1039 = vmatpush1.xpose.msra.mxu0 0.0
        %1040 = vmatprep.subr.mxu0 0.0
        %1041 = vmatpush1.xpose.msra.mxu0 0.0
        %1042 = vmatprep.subr.mxu0 0.0
        %1043 = vmatpush1.xpose.msra.mxu0 0.0
        %1044 = vmatprep.subr.mxu0 0.0
        %1045 = vmatpush1.xpose.msra.mxu0 0.0
        %1046 = vmatprep.subr.mxu0 0.0
        %1047 = vmatpush1.xpose.msra.mxu0 0.0
        %1048 = vmatprep.subr.mxu0 0.0
        %1049 = vmatpush1.xpose.msra.mxu0 0.0
        %1050 = vmatprep.subr.mxu0 0.0
        %1051 = vmatpush1.xpose.msra.mxu0 0.0
        %1052 = vmatprep.subr.mxu0 0.0
        %1053 = vmatpush1.xpose.msra.mxu0 0.0
        %1054 = vmatprep.subr.mxu0 0.0
        %1055 = vmatpush1.xpose.msra.mxu0 0.0
        %1056 = vmatprep.subr.mxu0 0.0
        %1057 = vmatpush1.xpose.msra.mxu0 0.0
        %1058 = vmatprep.subr.mxu0 0.0
        %1059 = vmatpush1.xpose.msra.mxu0 0.0
        %1060 = vmatprep.subr.mxu0 0.0
        %1061 = vmatpush1.xpose.msra.mxu0 0.0
        %1062 = vmatprep.subr.mxu0 0.0
        %1063 = vmatpush1.xpose.msra.mxu0 0.0
        %1064 = vmatprep.subr.mxu0 0.0
        %1065 = vmatpush1.xpose.msra.mxu0 0.0
        %1066 = vmatprep.subr.mxu0 0.0
        %1067 = vmatpush1.xpose.msra.mxu0 0.0
        %1068 = vmatprep.subr.mxu0 0.0
        %1069 = vmatpush1.xpose.msra.mxu0 0.0
        %1070 = vmatprep.subr.mxu0 0.0
        %1071 = vmatpush1.xpose.msra.mxu0 0.0
        %1072 = vmatprep.subr.mxu0 0.0
        %1073 = vmatpush1.xpose.msra.mxu0 0.0
        %1074 = vmatprep.subr.mxu0 0.0
        %1075 = vmatpush1.xpose.msra.mxu0 0.0
        %1076 = vmatprep.subr.mxu0 0.0
        %1077 = vmatpush1.xpose.msra.mxu0 0.0
        %1078 = vmatprep.subr.mxu0 0.0
        %1079 = vmatpush1.xpose.msra.mxu0 0.0
        %1080 = vmatprep.subr.mxu0 0.0
        %1081 = vmatpush1.xpose.msra.mxu0 0.0
        %1082 = vmatprep.subr.mxu0 0.0
        %1083 = vmatpush1.xpose.msra.mxu0 0.0
        %1084 = vmatprep.subr.mxu0 0.0
        %1085 = vmatpush1.xpose.msra.mxu0 0.0
        %1086 = vmatprep.mubr.f32.mxu0 0.0
        %1087 = vmatmul.mubr.f32.gmra.mrb[0].mxu0 %v1018
        %v1088 = vpop.f32.mrb[0].mxu0
        %v1089 = vadd.f32 %v851, %v1088
        %v1090 = vpop.f32.mrb[0].mxu0
        %1091 = vdwg.mxu0
        %v1092 = vsel %vm852, %v1089, -inf
        %1093 = vmax.xlane.f32.xlu0 %v1092
        %v1094 = vpop.xlane.xlu0 %1093
        %v1095 = vsub.f32 %v1089, %v1094
        %v1096 = vmul.f32 %v1095, 1.442695
        %v1097 = vpow.pop %v1096
        %v1098 = vsel %vm852, %v1097, 0.0
        %1099 = vadd.xlane.f32.xlu0 %v1098
        %v1100 = vpop.xlane.xlu0 %1099
        %v1101 = vrcp.pop %v1100
        %v1102 = vmul.f32 %v1097, %v1101
        %1104 = vrot.lane.b32.xlu0 %v848, 120
        %v1105 = vpop.permute.xlu0 %1104
        %v1108 = vsel %vm852, %v1102, 0
        %1110 = vmatprep.subr.mxu0 0.0
        %1111 = vmatpush1.msra.mxu0 %v1105
        %1112 = vmatprep.subr.mxu0 0.0
        %1113 = vmatpush1.msra.mxu0 0.0
        %1114 = vmatprep.subr.mxu0 0.0
        %1115 = vmatpush1.msra.mxu0 0.0
        %1116 = vmatprep.subr.mxu0 0.0
        %1117 = vmatpush1.msra.mxu0 0.0
        %1118 = vmatprep.subr.mxu0 0.0
        %1119 = vmatpush1.msra.mxu0 0.0
        %1120 = vmatprep.subr.mxu0 0.0
        %1121 = vmatpush1.msra.mxu0 0.0
        %1122 = vmatprep.subr.mxu0 0.0
        %1123 = vmatpush1.msra.mxu0 0.0
        %1124 = vmatprep.subr.mxu0 0.0
        %1125 = vmatpush1.msra.mxu0 0.0
        %1126 = vmatprep.subr.mxu0 0.0
        %1127 = vmatpush1.msra.mxu0 0.0
        %1128 = vmatprep.subr.mxu0 0.0
        %1129 = vmatpush1.msra.mxu0 0.0
        %1130 = vmatprep.subr.mxu0 0.0
        %1131 = vmatpush1.msra.mxu0 0.0
        %1132 = vmatprep.subr.mxu0 0.0
        %1133 = vmatpush1.msra.mxu0 0.0
        %1134 = vmatprep.subr.mxu0 0.0
        %1135 = vmatpush1.msra.mxu0 0.0
        %1136 = vmatprep.subr.mxu0 0.0
        %1137 = vmatpush1.msra.mxu0 0.0
        %1138 = vmatprep.subr.mxu0 0.0
        %1139 = vmatpush1.msra.mxu0 0.0
        %1140 = vmatprep.subr.mxu0 0.0
        %1141 = vmatpush1.msra.mxu0 0.0
        %1142 = vmatprep.subr.mxu0 0.0
        %1143 = vmatpush1.msra.mxu0 0.0
        %1144 = vmatprep.subr.mxu0 0.0
        %1145 = vmatpush1.msra.mxu0 0.0
        %1146 = vmatprep.subr.mxu0 0.0
        %1147 = vmatpush1.msra.mxu0 0.0
        %1148 = vmatprep.subr.mxu0 0.0
        %1149 = vmatpush1.msra.mxu0 0.0
        %1150 = vmatprep.subr.mxu0 0.0
        %1151 = vmatpush1.msra.mxu0 0.0
        %1152 = vmatprep.subr.mxu0 0.0
        %1153 = vmatpush1.msra.mxu0 0.0
        %1154 = vmatprep.subr.mxu0 0.0
        %1155 = vmatpush1.msra.mxu0 0.0
        %1156 = vmatprep.subr.mxu0 0.0
        %1157 = vmatpush1.msra.mxu0 0.0
        %1158 = vmatprep.subr.mxu0 0.0
        %1159 = vmatpush1.msra.mxu0 0.0
        %1160 = vmatprep.subr.mxu0 0.0
        %1161 = vmatpush1.msra.mxu0 0.0
        %1162 = vmatprep.subr.mxu0 0.0
        %1163 = vmatpush1.msra.mxu0 0.0
        %1164 = vmatprep.subr.mxu0 0.0
        %1165 = vmatpush1.msra.mxu0 0.0
        %1166 = vmatprep.subr.mxu0 0.0
        %1167 = vmatpush1.msra.mxu0 0.0
        %1168 = vmatprep.subr.mxu0 0.0
        %1169 = vmatpush1.msra.mxu0 0.0
        %1170 = vmatprep.subr.mxu0 0.0
        %1171 = vmatpush1.msra.mxu0 0.0
        %1172 = vmatprep.subr.mxu0 0.0
        %1173 = vmatpush1.msra.mxu0 0.0
        %1174 = vmatprep.mubr.f32.mxu0 0.0
        %1175 = vmatmul.mubr.f32.gmra.mrb[0].mxu0 %v1108
        %v1176 = vpop.f32.mrb[0].mxu0
        %v1177 = vadd.f32 0.0, %v1176
        %v1178 = vpop.f32.mrb[0].mxu0
        %1179 = vdwg.mxu0
        %1181 = vrot.lane.b32.xlu0 %v1177, 8
        %v1182 = vpop.permute.xlu0 %1181
        %vm1184 = vcmask 130112
        %1185 = vst.msk [vmem:[#allocation2] sm:$0xff] %vm1184, %v1182
        %1186 = vrot.lane.b32.xlu0 %v680, 112
        %v1187 = vpop.permute.xlu0 %1186
        %1188 = vrot.lane.b32.xlu0 %v764, 112
        %v1189 = vpop.permute.xlu0 %1188
        %v1190 = vsel %vm852, %v1187, 0
        %v1192 = vsel %vm852, %v1189, 0
        %1194 = vmatprep.subr.mxu0 0.0
        %1195 = vmatpush1.xpose.msra.mxu0 %v1192
        %1196 = vmatprep.subr.mxu0 0.0
        %1197 = vmatpush1.xpose.msra.mxu0 0.0
        %1198 = vmatprep.subr.mxu0 0.0
        %1199 = vmatpush1.xpose.msra.mxu0 0.0
        %1200 = vmatprep.subr.mxu0 0.0
        %1201 = vmatpush1.xpose.msra.mxu0 0.0
        %1202 = vmatprep.subr.mxu0 0.0
        %1203 = vmatpush1.xpose.msra.mxu0 0.0
        %1204 = vmatprep.subr.mxu0 0.0
        %1205 = vmatpush1.xpose.msra.mxu0 0.0
        %1206 = vmatprep.subr.mxu0 0.0
        %1207 = vmatpush1.xpose.msra.mxu0 0.0
        %1208 = vmatprep.subr.mxu0 0.0
        %1209 = vmatpush1.xpose.msra.mxu0 0.0
        %1210 = vmatprep.subr.mxu0 0.0
        %1211 = vmatpush1.xpose.msra.mxu0 0.0
        %1212 = vmatprep.subr.mxu0 0.0
        %1213 = vmatpush1.xpose.msra.mxu0 0.0
        %1214 = vmatprep.subr.mxu0 0.0
        %1215 = vmatpush1.xpose.msra.mxu0 0.0
        %1216 = vmatprep.subr.mxu0 0.0
        %1217 = vmatpush1.xpose.msra.mxu0 0.0
        %1218 = vmatprep.subr.mxu0 0.0
        %1219 = vmatpush1.xpose.msra.mxu0 0.0
        %1220 = vmatprep.subr.mxu0 0.0
        %1221 = vmatpush1.xpose.msra.mxu0 0.0
        %1222 = vmatprep.subr.mxu0 0.0
        %1223 = vmatpush1.xpose.msra.mxu0 0.0
        %1224 = vmatprep.subr.mxu0 0.0
        %1225 = vmatpush1.xpose.msra.mxu0 0.0
        %1226 = vmatprep.subr.mxu0 0.0
        %1227 = vmatpush1.xpose.msra.mxu0 0.0
        %1228 = vmatprep.subr.mxu0 0.0
        %1229 = vmatpush1.xpose.msra.mxu0 0.0
        %1230 = vmatprep.subr.mxu0 0.0
        %1231 = vmatpush1.xpose.msra.mxu0 0.0
        %1232 = vmatprep.subr.mxu0 0.0
        %1233 = vmatpush1.xpose.msra.mxu0 0.0
        %1234 = vmatprep.subr.mxu0 0.0
        %1235 = vmatpush1.xpose.msra.mxu0 0.0
        %1236 = vmatprep.subr.mxu0 0.0
        %1237 = vmatpush1.xpose.msra.mxu0 0.0
        %1238 = vmatprep.subr.mxu0 0.0
        %1239 = vmatpush1.xpose.msra.mxu0 0.0
        %1240 = vmatprep.subr.mxu0 0.0
        %1241 = vmatpush1.xpose.msra.mxu0 0.0
        %1242 = vmatprep.subr.mxu0 0.0
        %1243 = vmatpush1.xpose.msra.mxu0 0.0
        %1244 = vmatprep.subr.mxu0 0.0
        %1245 = vmatpush1.xpose.msra.mxu0 0.0
        %1246 = vmatprep.subr.mxu0 0.0
        %1247 = vmatpush1.xpose.msra.mxu0 0.0
        %1248 = vmatprep.subr.mxu0 0.0
        %1249 = vmatpush1.xpose.msra.mxu0 0.0
        %1250 = vmatprep.subr.mxu0 0.0
        %1251 = vmatpush1.xpose.msra.mxu0 0.0
        %1252 = vmatprep.subr.mxu0 0.0
        %1253 = vmatpush1.xpose.msra.mxu0 0.0
        %1254 = vmatprep.subr.mxu0 0.0
        %1255 = vmatpush1.xpose.msra.mxu0 0.0
        %1256 = vmatprep.subr.mxu0 0.0
        %1257 = vmatpush1.xpose.msra.mxu0 0.0
        %1258 = vmatprep.mubr.f32.mxu0 0.0
        %1259 = vmatmul.mubr.f32.gmra.mrb[0].mxu0 %v1190
        %v1260 = vpop.f32.mrb[0].mxu0
        %v1261 = vadd.f32 %v851, %v1260
        %v1262 = vpop.f32.mrb[0].mxu0
        %1263 = vdwg.mxu0
        %v1264 = vsel %vm852, %v1261, -inf
        %1265 = vmax.xlane.f32.xlu0 %v1264
        %v1266 = vpop.xlane.xlu0 %1265
        %v1267 = vsub.f32 %v1261, %v1266
        %v1268 = vmul.f32 %v1267, 1.442695
        %v1269 = vpow.pop %v1268
        %v1270 = vsel %vm852, %v1269, 0.0
        %1271 = vadd.xlane.f32.xlu0 %v1270
        %v1272 = vpop.xlane.xlu0 %1271
        %v1273 = vrcp.pop %v1272
        %v1274 = vmul.f32 %v1269, %v1273
        %1275 = vrot.lane.b32.xlu0 %v848, 112
        %v1276 = vpop.permute.xlu0 %1275
        %v1279 = vsel %vm852, %v1274, 0
        %1281 = vmatprep.subr.mxu0 0.0
        %1282 = vmatpush1.msra.mxu0 %v1276
        %1283 = vmatprep.subr.mxu0 0.0
        %1284 = vmatpush1.msra.mxu0 0.0
        %1285 = vmatprep.subr.mxu0 0.0
        %1286 = vmatpush1.msra.mxu0 0.0
        %1287 = vmatprep.subr.mxu0 0.0
        %1288 = vmatpush1.msra.mxu0 0.0
        %1289 = vmatprep.subr.mxu0 0.0
        %1290 = vmatpush1.msra.mxu0 0.0
        %1291 = vmatprep.subr.mxu0 0.0
        %1292 = vmatpush1.msra.mxu0 0.0
        %1293 = vmatprep.subr.mxu0 0.0
        %1294 = vmatpush1.msra.mxu0 0.0
        %1295 = vmatprep.subr.mxu0 0.0
        %1296 = vmatpush1.msra.mxu0 0.0
        %1297 = vmatprep.subr.mxu0 0.0
        %1298 = vmatpush1.msra.mxu0 0.0
        %1299 = vmatprep.subr.mxu0 0.0
        %1300 = vmatpush1.msra.mxu0 0.0
        %1301 = vmatprep.subr.mxu0 0.0
        %1302 = vmatpush1.msra.mxu0 0.0
        %1303 = vmatprep.subr.mxu0 0.0
        %1304 = vmatpush1.msra.mxu0 0.0
        %1305 = vmatprep.subr.mxu0 0.0
        %1306 = vmatpush1.msra.mxu0 0.0
        %1307 = vmatprep.subr.mxu0 0.0
        %1308 = vmatpush1.msra.mxu0 0.0
        %1309 = vmatprep.subr.mxu0 0.0
        %1310 = vmatpush1.msra.mxu0 0.0
        %1311 = vmatprep.subr.mxu0 0.0
        %1312 = vmatpush1.msra.mxu0 0.0
        %1313 = vmatprep.subr.mxu0 0.0
        %1314 = vmatpush1.msra.mxu0 0.0
        %1315 = vmatprep.subr.mxu0 0.0
        %1316 = vmatpush1.msra.mxu0 0.0
        %1317 = vmatprep.subr.mxu0 0.0
        %1318 = vmatpush1.msra.mxu0 0.0
        %1319 = vmatprep.subr.mxu0 0.0
        %1320 = vmatpush1.msra.mxu0 0.0
        %1321 = vmatprep.subr.mxu0 0.0
        %1322 = vmatpush1.msra.mxu0 0.0
        %1323 = vmatprep.subr.mxu0 0.0
        %1324 = vmatpush1.msra.mxu0 0.0
        %1325 = vmatprep.subr.mxu0 0.0
        %1326 = vmatpush1.msra.mxu0 0.0
        %1327 = vmatprep.subr.mxu0 0.0
        %1328 = vmatpush1.msra.mxu0 0.0
        %1329 = vmatprep.subr.mxu0 0.0
        %1330 = vmatpush1.msra.mxu0 0.0
        %1331 = vmatprep.subr.mxu0 0.0
        %1332 = vmatpush1.msra.mxu0 0.0
        %1333 = vmatprep.subr.mxu0 0.0
        %1334 = vmatpush1.msra.mxu0 0.0
        %1335 = vmatprep.subr.mxu0 0.0
        %1336 = vmatpush1.msra.mxu0 0.0
        %1337 = vmatprep.subr.mxu0 0.0
        %1338 = vmatpush1.msra.mxu0 0.0
        %1339 = vmatprep.subr.mxu0 0.0
        %1340 = vmatpush1.msra.mxu0 0.0
        %1341 = vmatprep.subr.mxu0 0.0
        %1342 = vmatpush1.msra.mxu0 0.0
        %1343 = vmatprep.subr.mxu0 0.0
        %1344 = vmatpush1.msra.mxu0 0.0
        %1345 = vmatprep.mubr.f32.mxu0 0.0
        %1346 = vmatmul.mubr.f32.gmra.mrb[0].mxu0 %v1279
        %v1347 = vpop.f32.mrb[0].mxu0
        %v1348 = vadd.f32 0.0, %v1347
        %v1349 = vpop.f32.mrb[0].mxu0
        %1350 = vdwg.mxu0
        %1352 = vrot.lane.b32.xlu0 %v1348, 16
        %v1353 = vpop.permute.xlu0 %1352
        %vm1355 = vcmask 195712
        %1356 = vst.msk [vmem:[#allocation2] sm:$0xff] %vm1355, %v1353
        %1357 = vrot.lane.b32.xlu0 %v680, 104
        %v1358 = vpop.permute.xlu0 %1357
        %1359 = vrot.lane.b32.xlu0 %v764, 104
        %v1360 = vpop.permute.xlu0 %1359
        %v1361 = vsel %vm852, %v1358, 0
        %v1363 = vsel %vm852, %v1360, 0
        %1365 = vmatprep.subr.mxu0 0.0
        %1366 = vmatpush1.xpose.msra.mxu0 %v1363
        %1367 = vmatprep.subr.mxu0 0.0
        %1368 = vmatpush1.xpose.msra.mxu0 0.0
        %1369 = vmatprep.subr.mxu0 0.0
        %1370 = vmatpush1.xpose.msra.mxu0 0.0
        %1371 = vmatprep.subr.mxu0 0.0
        %1372 = vmatpush1.xpose.msra.mxu0 0.0
        %1373 = vmatprep.subr.mxu0 0.0
        %1374 = vmatpush1.xpose.msra.mxu0 0.0
        %1375 = vmatprep.subr.mxu0 0.0
        %1376 = vmatpush1.xpose.msra.mxu0 0.0
        %1377 = vmatprep.subr.mxu0 0.0
        %1378 = vmatpush1.xpose.msra.mxu0 0.0
        %1379 = vmatprep.subr.mxu0 0.0
        %1380 = vmatpush1.xpose.msra.mxu0 0.0
        %1381 = vmatprep.subr.mxu0 0.0
        %1382 = vmatpush1.xpose.msra.mxu0 0.0
        %1383 = vmatprep.subr.mxu0 0.0
        %1384 = vmatpush1.xpose.msra.mxu0 0.0
        %1385 = vmatprep.subr.mxu0 0.0
        %1386 = vmatpush1.xpose.msra.mxu0 0.0
        %1387 = vmatprep.subr.mxu0 0.0
        %1388 = vmatpush1.xpose.msra.mxu0 0.0
        %1389 = vmatprep.subr.mxu0 0.0
        %1390 = vmatpush1.xpose.msra.mxu0 0.0
        %1391 = vmatprep.subr.mxu0 0.0
        %1392 = vmatpush1.xpose.msra.mxu0 0.0
        %1393 = vmatprep.subr.mxu0 0.0
        %1394 = vmatpush1.xpose.msra.mxu0 0.0
        %1395 = vmatprep.subr.mxu0 0.0
        %1396 = vmatpush1.xpose.msra.mxu0 0.0
        %1397 = vmatprep.subr.mxu0 0.0
        %1398 = vmatpush1.xpose.msra.mxu0 0.0
        %1399 = vmatprep.subr.mxu0 0.0
        %1400 = vmatpush1.xpose.msra.mxu0 0.0
        %1401 = vmatprep.subr.mxu0 0.0
        %1402 = vmatpush1.xpose.msra.mxu0 0.0
        %1403 = vmatprep.subr.mxu0 0.0
        %1404 = vmatpush1.xpose.msra.mxu0 0.0
        %1405 = vmatprep.subr.mxu0 0.0
        %1406 = vmatpush1.xpose.msra.mxu0 0.0
        %1407 = vmatprep.subr.mxu0 0.0
        %1408 = vmatpush1.xpose.msra.mxu0 0.0
        %1409 = vmatprep.subr.mxu0 0.0
        %1410 = vmatpush1.xpose.msra.mxu0 0.0
        %1411 = vmatprep.subr.mxu0 0.0
        %1412 = vmatpush1.xpose.msra.mxu0 0.0
        %1413 = vmatprep.subr.mxu0 0.0
        %1414 = vmatpush1.xpose.msra.mxu0 0.0
        %1415 = vmatprep.subr.mxu0 0.0
        %1416 = vmatpush1.xpose.msra.mxu0 0.0
        %1417 = vmatprep.subr.mxu0 0.0
        %1418 = vmatpush1.xpose.msra.mxu0 0.0
        %1419 = vmatprep.subr.mxu0 0.0
        %1420 = vmatpush1.xpose.msra.mxu0 0.0
        %1421 = vmatprep.subr.mxu0 0.0
        %1422 = vmatpush1.xpose.msra.mxu0 0.0
        %1423 = vmatprep.subr.mxu0 0.0
        %1424 = vmatpush1.xpose.msra.mxu0 0.0
        %1425 = vmatprep.subr.mxu0 0.0
        %1426 = vmatpush1.xpose.msra.mxu0 0.0
        %1427 = vmatprep.subr.mxu0 0.0
        %1428 = vmatpush1.xpose.msra.mxu0 0.0
        %1429 = vmatprep.mubr.f32.mxu0 0.0
        %1430 = vmatmul.mubr.f32.gmra.mrb[0].mxu0 %v1361
        %v1431 = vpop.f32.mrb[0].mxu0
        %v1432 = vadd.f32 %v851, %v1431
        %v1433 = vpop.f32.mrb[0].mxu0
        %1434 = vdwg.mxu0
        %v1435 = vsel %vm852, %v1432, -inf
        %1436 = vmax.xlane.f32.xlu0 %v1435
        %v1437 = vpop.xlane.xlu0 %1436
        %v1438 = vsub.f32 %v1432, %v1437
        %v1439 = vmul.f32 %v1438, 1.442695
        %v1440 = vpow.pop %v1439
        %v1441 = vsel %vm852, %v1440, 0.0
        %1442 = vadd.xlane.f32.xlu0 %v1441
        %v1443 = vpop.xlane.xlu0 %1442
        %v1444 = vrcp.pop %v1443
        %v1445 = vmul.f32 %v1440, %v1444
        %1446 = vrot.lane.b32.xlu0 %v848, 104
        %v1447 = vpop.permute.xlu0 %1446
        %v1450 = vsel %vm852, %v1445, 0
        %1452 = vmatprep.subr.mxu0 0.0
        %1453 = vmatpush1.msra.mxu0 %v1447
        %1454 = vmatprep.subr.mxu0 0.0
        %1455 = vmatpush1.msra.mxu0 0.0
        %1456 = vmatprep.subr.mxu0 0.0
        %1457 = vmatpush1.msra.mxu0 0.0
        %1458 = vmatprep.subr.mxu0 0.0
        %1459 = vmatpush1.msra.mxu0 0.0
        %1460 = vmatprep.subr.mxu0 0.0
        %1461 = vmatpush1.msra.mxu0 0.0
        %1462 = vmatprep.subr.mxu0 0.0
        %1463 = vmatpush1.msra.mxu0 0.0
        %1464 = vmatprep.subr.mxu0 0.0
        %1465 = vmatpush1.msra.mxu0 0.0
        %1466 = vmatprep.subr.mxu0 0.0
        %1467 = vmatpush1.msra.mxu0 0.0
        %1468 = vmatprep.subr.mxu0 0.0
        %1469 = vmatpush1.msra.mxu0 0.0
        %1470 = vmatprep.subr.mxu0 0.0
        %1471 = vmatpush1.msra.mxu0 0.0
        %1472 = vmatprep.subr.mxu0 0.0
        %1473 = vmatpush1.msra.mxu0 0.0
        %1474 = vmatprep.subr.mxu0 0.0
        %1475 = vmatpush1.msra.mxu0 0.0
        %1476 = vmatprep.subr.mxu0 0.0
        %1477 = vmatpush1.msra.mxu0 0.0
        %1478 = vmatprep.subr.mxu0 0.0
        %1479 = vmatpush1.msra.mxu0 0.0
        %1480 = vmatprep.subr.mxu0 0.0
        %1481 = vmatpush1.msra.mxu0 0.0
        %1482 = vmatprep.subr.mxu0 0.0
        %1483 = vmatpush1.msra.mxu0 0.0
        %1484 = vmatprep.subr.mxu0 0.0
        %1485 = vmatpush1.msra.mxu0 0.0
        %1486 = vmatprep.subr.mxu0 0.0
        %1487 = vmatpush1.msra.mxu0 0.0
        %1488 = vmatprep.subr.mxu0 0.0
        %1489 = vmatpush1.msra.mxu0 0.0
        %1490 = vmatprep.subr.mxu0 0.0
        %1491 = vmatpush1.msra.mxu0 0.0
        %1492 = vmatprep.subr.mxu0 0.0
        %1493 = vmatpush1.msra.mxu0 0.0
        %1494 = vmatprep.subr.mxu0 0.0
        %1495 = vmatpush1.msra.mxu0 0.0
        %1496 = vmatprep.subr.mxu0 0.0
        %1497 = vmatpush1.msra.mxu0 0.0
        %1498 = vmatprep.subr.mxu0 0.0
        %1499 = vmatpush1.msra.mxu0 0.0
        %1500 = vmatprep.subr.mxu0 0.0
        %1501 = vmatpush1.msra.mxu0 0.0
        %1502 = vmatprep.subr.mxu0 0.0
        %1503 = vmatpush1.msra.mxu0 0.0
        %1504 = vmatprep.subr.mxu0 0.0
        %1505 = vmatpush1.msra.mxu0 0.0
        %1506 = vmatprep.subr.mxu0 0.0
        %1507 = vmatpush1.msra.mxu0 0.0
        %1508 = vmatprep.subr.mxu0 0.0
        %1509 = vmatpush1.msra.mxu0 0.0
        %1510 = vmatprep.subr.mxu0 0.0
        %1511 = vmatpush1.msra.mxu0 0.0
        %1512 = vmatprep.subr.mxu0 0.0
        %1513 = vmatpush1.msra.mxu0 0.0
        %1514 = vmatprep.subr.mxu0 0.0
        %1515 = vmatpush1.msra.mxu0 0.0
        %1516 = vmatprep.mubr.f32.mxu0 0.0
        %1517 = vmatmul.mubr.f32.gmra.mrb[0].mxu0 %v1450
        %v1518 = vpop.f32.mrb[0].mxu0
        %v1519 = vadd.f32 0.0, %v1518
        %v1520 = vpop.f32.mrb[0].mxu0
        %1521 = vdwg.mxu0
        %1523 = vrot.lane.b32.xlu0 %v1519, 24
        %v1524 = vpop.permute.xlu0 %1523
        %vm1526 = vcmask 261312
        %1527 = vst.msk [vmem:[#allocation2] sm:$0xff] %vm1526, %v1524
        %v1528 = vld [vmem:[#allocation2] sm:$0xff]
        %v1529 = vld [vmem:[#allocation15] sm:$0xff]
        %v1530 = vld [vmem:[#allocation15 + $0x8] sm:$0xff]
        %v1531 = vld [vmem:[#allocation15 + $0x10] sm:$0xff]
        %v1532 = vld [vmem:[#allocation15 + $0x18] sm:$0xff]
        %v1533 = vld [vmem:[%s11] sm:$0x1]
        %v1535 = vlaneseq
        %v1536 = vshrl.u32 %v1535, 7
        %v1537 = vsub.s32 0, %v1536
        %v1538 = vrot.slane %v1533, %v1537
        %v1541 = vsel %vm609, %v1528, 0
        %1543 = vmatprep.subr.mxu0 0.0
        %1544 = vmatpush1.msra.mxu0 %v1529
        %1545 = vmatprep.subr.mxu0 0.0
        %1546 = vmatpush1.msra.mxu0 %v1530
        %1547 = vmatprep.subr.mxu0 0.0
        %1548 = vmatpush1.msra.mxu0 %v1531
        %1549 = vmatprep.subr.mxu0 0.0
        %1550 = vmatpush1.msra.mxu0 %v1532
        %1551 = vmatprep.subr.mxu0 0.0
        %1552 = vmatpush1.msra.mxu0 0.0
        %1553 = vmatprep.subr.mxu0 0.0
        %1554 = vmatpush1.msra.mxu0 0.0
        %1555 = vmatprep.subr.mxu0 0.0
        %1556 = vmatpush1.msra.mxu0 0.0
        %1557 = vmatprep.subr.mxu0 0.0
        %1558 = vmatpush1.msra.mxu0 0.0
        %1559 = vmatprep.subr.mxu0 0.0
        %1560 = vmatpush1.msra.mxu0 0.0
        %1561 = vmatprep.subr.mxu0 0.0
        %1562 = vmatpush1.msra.mxu0 0.0
        %1563 = vmatprep.subr.mxu0 0.0
        %1564 = vmatpush1.msra.mxu0 0.0
        %1565 = vmatprep.subr.mxu0 0.0
        %1566 = vmatpush1.msra.mxu0 0.0
        %1567 = vmatprep.subr.mxu0 0.0
        %1568 = vmatpush1.msra.mxu0 0.0
        %1569 = vmatprep.subr.mxu0 0.0
        %1570 = vmatpush1.msra.mxu0 0.0
        %1571 = vmatprep.subr.mxu0 0.0
        %1572 = vmatpush1.msra.mxu0 0.0
        %1573 = vmatprep.subr.mxu0 0.0
        %1574 = vmatpush1.msra.mxu0 0.0
        %1575 = vmatprep.subr.mxu0 0.0
        %1576 = vmatpush1.msra.mxu0 0.0
        %1577 = vmatprep.subr.mxu0 0.0
        %1578 = vmatpush1.msra.mxu0 0.0
        %1579 = vmatprep.subr.mxu0 0.0
        %1580 = vmatpush1.msra.mxu0 0.0
        %1581 = vmatprep.subr.mxu0 0.0
        %1582 = vmatpush1.msra.mxu0 0.0
        %1583 = vmatprep.subr.mxu0 0.0
        %1584 = vmatpush1.msra.mxu0 0.0
        %1585 = vmatprep.subr.mxu0 0.0
        %1586 = vmatpush1.msra.mxu0 0.0
        %1587 = vmatprep.subr.mxu0 0.0
        %1588 = vmatpush1.msra.mxu0 0.0
        %1589 = vmatprep.subr.mxu0 0.0
        %1590 = vmatpush1.msra.mxu0 0.0
        %1591 = vmatprep.subr.mxu0 0.0
        %1592 = vmatpush1.msra.mxu0 0.0
        %1593 = vmatprep.subr.mxu0 0.0
        %1594 = vmatpush1.msra.mxu0 0.0
        %1595 = vmatprep.subr.mxu0 0.0
        %1596 = vmatpush1.msra.mxu0 0.0
        %1597 = vmatprep.subr.mxu0 0.0
        %1598 = vmatpush1.msra.mxu0 0.0
        %1599 = vmatprep.subr.mxu0 0.0
        %1600 = vmatpush1.msra.mxu0 0.0
        %1601 = vmatprep.subr.mxu0 0.0
        %1602 = vmatpush1.msra.mxu0 0.0
        %1603 = vmatprep.subr.mxu0 0.0
        %1604 = vmatpush1.msra.mxu0 0.0
        %1605 = vmatprep.subr.mxu0 0.0
        %1606 = vmatpush1.msra.mxu0 0.0
        %1607 = vmatprep.mubr.f32.mxu0 0.0
        %1608 = vmatmul.mubr.f32.gmra.mrb[0].mxu0 %v1541
        %v1609 = vpop.f32.mrb[0].mxu0
        %v1610 = vadd.f32 %v1538, %v1609
        %v1611 = vpop.f32.mrb[0].mxu0
        %1612 = vdwg.mxu0
        %1613 = vst.msk [vmem:[%s594] sm:$0xff] %vm609, %v1610
        %s1614 = sand.u32 %s317, 1
        %s1615 = scalar_lea.sflag [#allocation5], %s1614
        %s1616 = sand.u32 %s317, 1
        %s1617 = smul.addr %s1616, 8
        %s1618 = scalar_lea.vmem [#allocation17], %s1617
        // Predicated region
        $region101: #{tpu_custom_call.1} parent=67 // pred_check
          %p1619 = pneg %p327
        $region102: #{tpu_custom_call.1} parent=67 // pred_check_branch
          %1621 = sbr.rel (%p1619) target = $region104
        $region103: #{tpu_custom_call.1} parent=67 // pred_region
          %s1623 = ssub.s32 128, 128
          %1624 = vsyncadd %s1615, %s1623
          %s1625 = smul.addr %s37, 128
          %s1626 = scalar_lea.hbm %s12, %s1625
          %s1628 = sshll.u32 %s1618, 4
          %s1629 = int_to_ptr.vmem [resolvable:$true] %s1628
          %1631 = dma.vmem_to_hbm [thread:$0]  %s1629, 128, %s1626, %s1615
        $region104: #{tpu_custom_call.1} parent=67 // pred_fallthru
          _
      $region68: #{tpu_custom_call.1} parent=5 // pred_fallthru
        _
      %p1632 = scmp.le.s32.totalorder 2, %s32
      // Predicated region
      $region105: #{tpu_custom_call.1} parent=5 // pred_check
        %p1633 = pneg %p1632
      $region106: #{tpu_custom_call.1} parent=5 // pred_check_branch
        %1635 = sbr.rel (%p1633) target = $region108
      $region107: #{tpu_custom_call.1} parent=5 // pred_region
        %s1636 = ssub.s32 %s32, 2
        // Predicated region
        $region109: #{tpu_custom_call.1} parent=107 // pred_check
          %p1637 = pneg %p333
        $region110: #{tpu_custom_call.1} parent=107 // pred_check_branch
          %1639 = sbr.rel (%p1637) target = $region112
        $region111: #{tpu_custom_call.1} parent=107 // pred_region
          %s1640 = sand.u32 %s318, 1
          %s1641 = scalar_lea.sflag [#allocation5], %s1640
          %s1642 = sand.u32 %s318, 1
          %s1643 = smul.addr %s1642, 8
          %s1644 = scalar_lea.vmem [#allocation17], %s1643
          %1645 = dma.done %s1641, 128
        $region112: #{tpu_custom_call.1} parent=107 // pred_fallthru
          _
      $region108: #{tpu_custom_call.1} parent=5 // pred_fallthru
        _
    $region6: #{tpu_custom_call.1} parent=1 // loop_footer
      %s36 = sadd.s32 1, %s32
    $region7: #{tpu_custom_call.1} parent=1 // loop_footer_branch
      %31 = sbr.rel target = $region3
    $region8: #{tpu_custom_call.1} parent=1 // loop_exit
      _
    %1646 = vsyncpa [#allocation4], 1
    %s1647 = scalar_lea.sflag [#allocation4], 1
    %1648 = vsyncpa %s1647, 1
    %1649 = vsyncpa [#allocation7], 1
    %s1650 = scalar_lea.sflag [#allocation7], 1
    %1651 = vsyncpa %s1650, 1
    %1652 = vsyncpa [#allocation10], 1
    %s1653 = scalar_lea.sflag [#allocation10], 1
    %1654 = vsyncpa %s1653, 1
    %1655 = vsyncpa [#allocation13], 1
    %1656 = vsyncpa [#allocation16], 1
    %1657 = vsyncpa [#allocation5], 1
    %s1658 = scalar_lea.sflag [#allocation5], 1
    %1659 = vsyncpa %s1658, 1

</llo_original>
